<compile_context>
chip_gen: v7x
topology: tpu7x:2x2x1
jax: 0.10.0
libtpu: 0.0.40
codegen_flags: <defaults>
</compile_context>

<pallas_src>
import functools

import jax
import jax.numpy as jnp
from jax.experimental import pallas as pl
from jax.experimental.pallas import tpu as pltpu


# ----------------------------- Pallas kernel --------------------------------
def _eblock_kernel(x_ref, w_ref, b_ref, o_ref, pad_ref, *, H, W, C, R, PAD):
    HW = H * W

    # Zero the halo strips of the staging buffer once per image.  The interior
    # store below never touches them, so they stay zero across the whole
    # R-loop (both convs of every ResBlock reuse them).
    strip = jnp.zeros((C, PAD), jnp.bfloat16)
    pad_ref[:, pl.ds(0, PAD)] = strip
    pad_ref[:, pl.ds(PAD + HW, PAD)] = strip

    # Horizontal-wrap validity masks (lane axis), hoisted out of the R loop.
    # The zero strips already handle every vertical boundary, so only the
    # dx = -1 / +1 taps need a select, and only 2 distinct masks exist.
    col = jax.lax.broadcasted_iota(jnp.int32, (1, HW), 1) % W
    ok_left = col != 0            # dx = -1 taps are invalid at x == 0
    ok_right = col != (W - 1)     # dx = +1 taps are invalid at x == W-1

    def conv3x3(src_f32, w_bf, bias_f32):
        # Stage the activation (cast to bf16 once) so every shifted 3x3 tap is
        # a static lane-offset pl.ds slice of the padded buffer.
        pad_ref[:, pl.ds(PAD, HW)] = src_f32.astype(jnp.bfloat16)
        cols = []
        for k in range(9):
            dy, dx = k // 3 - 1, k % 3 - 1
            t = pad_ref[:, pl.ds(PAD + dy * W + dx, HW)]       # (C, HW) bf16
            if dx == -1:
                t = jnp.where(ok_left, t, jnp.zeros_like(t))
            elif dx == 1:
                t = jnp.where(ok_right, t, jnp.zeros_like(t))
            cols.append(t)
        # Sublane-stacked im2col (9C, HW): sublane offsets are multiples of C
        # (aligned placement, no lane relayout) -> one lane-dense MXU matmul.
        patches = jnp.concatenate(cols, axis=0)
        y = jnp.dot(w_bf, patches, preferred_element_type=jnp.float32)
        return y + bias_f32                                    # (C, HW) f32

    def res_block(r, state):
        h = jnp.maximum(conv3x3(state, w_ref[r, 0], b_ref[r, 0]), 0.0)
        y = conv3x3(h, w_ref[r, 1], b_ref[r, 1])
        return state + y                                       # residual, f32

    state = x_ref[0].astype(jnp.float32)      # running state forced to f32
    state = jax.lax.fori_loop(0, R, res_block, state)
    o_ref[0] = state.astype(o_ref.dtype)


# ----------------------------- JAX glue --------------------------------------
def eblock_pallas(x_nchw, w1, b1, w2, b2):
    """x_nchw: (B, C, H, W).  w1/w2: (R, 3, 3, C, C) HWIO.  b1/b2: (R, C)."""
    B, C, H, W = x_nchw.shape
    R = w1.shape[0]
    HW = H * W
    PAD = ((W + 1 + 127) // 128) * 128        # zero halo >= W+1, lane aligned

    # Channel-major activations: NCHW reshapes directly to (B, C, H*W) —
    # channels on sublanes, pixels on lanes.  No wrapper transposes at all.
    x3 = x_nchw.reshape(B, C, HW)

    # Per-ResBlock weight matrices W_mat[co, k*C + ci] = w[ky, kx, ci, co] with
    # tap k = (dy+1)*3 + (dx+1), matching the im2col sublane ordering.  Both
    # convs of every ResBlock packed into one resident bf16 slab.
    def to_mat(w):                            # (R,3,3,C,C) -> (R, C, 9C)
        return jnp.transpose(w.reshape(R, 9 * C, C), (0, 2, 1))

    w_pack = jnp.stack([to_mat(w1), to_mat(w2)], axis=1).astype(jnp.bfloat16)
    b_pack = jnp.stack([b1, b2], axis=1)[..., None]       # (R, 2, C, 1) f32

    kernel = functools.partial(_eblock_kernel, H=H, W=W, C=C, R=R, PAD=PAD)
    # TODO(synk): at real image resolutions (H*W >> 256) tile the pixel axis
    # into row strips with a 1-row halo so the staging/patch buffers fit VMEM
    # (matters first on v7x with 64 MiB physical / 32 MiB scoped VMEM).
    out3 = pl.pallas_call(
        kernel,
        out_shape=jax.ShapeDtypeStruct((B, C, HW), x3.dtype),
        grid=(B,),
        in_specs=[
            pl.BlockSpec((1, C, HW), lambda b: (b, 0, 0)),           # image
            pl.BlockSpec((R, 2, C, 9 * C), lambda b: (0, 0, 0, 0)),  # all weights (resident)
            pl.BlockSpec((R, 2, C, 1), lambda b: (0, 0, 0, 0)),      # all biases (resident)
        ],
        out_specs=pl.BlockSpec((1, C, HW), lambda b: (b, 0, 0)),     # lane-dense output
        scratch_shapes=[pltpu.VMEM((C, HW + 2 * PAD), jnp.bfloat16)],
        compiler_params=pltpu.CompilerParams(
            dimension_semantics=("parallel",),    # one image per TC on v7x
        ),
    )(x3, w_pack, b_pack)

    return out3.reshape(B, C, H, W)


# ----------------------------- pure-JAX reference ----------------------------
def eblock_ref(x_nchw, w1, b1, w2, b2):
    y = jnp.transpose(x_nchw, (0, 2, 3, 1))
    dn = ("NHWC", "HWIO", "NHWC")
    for r in range(w1.shape[0]):
        h = jax.lax.conv_general_dilated(y, w1[r], (1, 1), "SAME",
                                         dimension_numbers=dn) + b1[r]
        h = jnp.maximum(h, 0.0)
        h = jax.lax.conv_general_dilated(h, w2[r], (1, 1), "SAME",
                                         dimension_numbers=dn) + b2[r]
        y = h + y
    return jnp.transpose(y, (0, 3, 1, 2))


# ----------------------------------- main -------------------------------------
if __name__ == "__main__":
    B, C, H, W = 2, 32, 16, 16   # out_channel = 32
    R = 8                        # num_res = 8 (EBlock default)

    key = jax.random.PRNGKey(0)
    k1, k2, k3, k4, k5 = jax.random.split(key, 5)
    scale = 0.1 / 3.0
    w1 = jax.random.normal(k1, (R, 3, 3, C, C), jnp.float32) * scale
    b1 = jax.random.normal(k2, (R, C), jnp.float32) * 0.1
    w2 = jax.random.normal(k3, (R, 3, 3, C, C), jnp.float32) * scale
    b2 = jax.random.normal(k4, (R, C), jnp.float32) * 0.1
    x = jax.random.normal(k5, (B, C, H, W), jnp.float32)

    out = jax.block_until_ready(eblock_pallas(x, w1, b1, w2, b2))
    ref = jax.block_until_ready(eblock_ref(x, w1, b1, w2, b2))
    assert out.shape == ref.shape == (B, C, H, W)
    max_err = float(jnp.max(jnp.abs(out - ref)))
    # bf16 matmul operands (f32 accumulation / f32 residual state) across 8 blocks.
    if not jnp.allclose(out, ref, atol=8e-2, rtol=8e-2):
        raise AssertionError(f"mismatch vs reference, max abs err = {max_err}")

    print("KERNEL_OK")
</pallas_src>

<mosaic_0001>
module attributes {stable_mosaic.version = 11 : i64} {
  func.func @_eblock_kernel(%arg0: i32, %arg1: memref<1x32x256xf32, #tpu.memory_space<vmem>>, %arg2: memref<8x2x32x288xbf16, #tpu.memory_space<vmem>>, %arg3: memref<8x2x32x1xf32, #tpu.memory_space<vmem>>, %arg4: memref<1x32x256xf32, #tpu.memory_space<vmem>>, %arg5: memref<32x512xbf16, #tpu.memory_space<vmem>>) attributes {dimension_semantics = [#tpu.dimension_semantics<parallel>], iteration_bounds = array<i64: 2>, scalar_prefetch = 0 : i64, scratch_operands = 1 : i64, tpu.core_type = #tpu.core_type<tc>, window_params = [{transform_indices = @transform_0, window_bounds = array<i64: 1, 32, 256>}, {pipeline_mode = #tpu.pipeline_mode<synchronous>, transform_indices = @transform_1, window_bounds = array<i64: 8, 2, 32, 288>}, {pipeline_mode = #tpu.pipeline_mode<synchronous>, transform_indices = @transform_2, window_bounds = array<i64: 8, 2, 32, 1>}, {transform_indices = @transform_3, window_bounds = array<i64: 1, 32, 256>}]} {
    %cst = arith.constant 0.000000e+00 : bf16
    %0 = vector.broadcast %cst : bf16 to vector<32x128xbf16>
    %c0 = arith.constant 0 : index
    %c0_0 = arith.constant 0 : index
    %1 = vector.load %arg5[%c0, %c0_0] : memref<32x512xbf16, #tpu.memory_space<vmem>>, vector<32x128xbf16>
    tpu.vector_store %arg5[%c0, %c0_0], %0 {strides = array<i32>} : memref<32x512xbf16, #tpu.memory_space<vmem>>, vector<32x128xbf16>,
    %c0_1 = arith.constant 0 : index
    %c384 = arith.constant 384 : index
    %2 = vector.load %arg5[%c0_1, %c384] : memref<32x512xbf16, #tpu.memory_space<vmem>>, vector<32x128xbf16>
    tpu.vector_store %arg5[%c0_1, %c384], %0 {strides = array<i32>} : memref<32x512xbf16, #tpu.memory_space<vmem>>, vector<32x128xbf16>,
    %3 = tpu.iota {dimensions = array<i32: 1>} : vector<1x256xi32>
    %c16_i32 = arith.constant 16 : i32
    %c0_i32 = arith.constant 0 : i32
    %4 = arith.cmpi eq, %c16_i32, %c0_i32 : i32
    %c1_i32 = arith.constant 1 : i32
    %5 = arith.select %4, %c1_i32, %c16_i32 : i32
    %6 = vector.broadcast %5 : i32 to vector<1x256xi32>
    %7 = arith.remsi %3, %6 : vector<1x256xi32>
    %c0_i32_2 = arith.constant 0 : i32
    %8 = vector.broadcast %c0_i32_2 : i32 to vector<1x256xi32>
    %9 = arith.cmpi ne, %7, %8 : vector<1x256xi32>
    %c0_i32_3 = arith.constant 0 : i32
    %10 = vector.broadcast %c0_i32_3 : i32 to vector<1x256xi32>
    %11 = arith.cmpi slt, %7, %10 : vector<1x256xi32>
    %c0_i32_4 = arith.constant 0 : i32
    %12 = arith.cmpi slt, %5, %c0_i32_4 : i32
    %13 = vector.broadcast %12 : i1 to vector<1x256xi1>
    %14 = vector.broadcast %13 : vector<1x256xi1> to vector<1x256xi1>
    %15 = arith.xori %11, %14 : vector<1x256xi1>
    %16 = arith.andi %15, %9 : vector<1x256xi1>
    %17 = vector.broadcast %5 : i32 to vector<1x256xi32>
    %18 = arith.addi %7, %17 : vector<1x256xi32>
    %19 = arith.select %16, %18, %7 : vector<1x256xi1>, vector<1x256xi32>
    %c0_i32_5 = arith.constant 0 : i32
    %20 = vector.broadcast %c0_i32_5 : i32 to vector<1x256xi32>
    %21 = arith.cmpi ne, %19, %20 : vector<1x256xi32>
    %c15_i32 = arith.constant 15 : i32
    %22 = vector.broadcast %c15_i32 : i32 to vector<1x256xi32>
    %23 = arith.cmpi ne, %19, %22 : vector<1x256xi32>
    %c0_6 = arith.constant 0 : index
    %c0_7 = arith.constant 0 : index
    %c0_8 = arith.constant 0 : index
    %24 = vector.load %arg1[%c0_6, %c0_7, %c0_8] : memref<1x32x256xf32, #tpu.memory_space<vmem>>, vector<1x32x256xf32>
    %25 = vector.shape_cast %24 : vector<1x32x256xf32> to vector<32x256xf32>
    %c0_i32_9 = arith.constant 0 : i32
    %c8_i32 = arith.constant 8 : i32
    %26 = arith.addi %c0_i32_9, %c8_i32 : i32
    %c1_i32_10 = arith.constant 1 : i32
    %27 = scf.for %arg6 = %c0_i32_9 to %26 step %c1_i32_10 iter_args(%arg7 = %25) -> (vector<32x256xf32>)  : i32 {
      %31 = arith.index_cast %arg6 : i32 to index
      %c0_15 = arith.constant 0 : index
      %c0_16 = arith.constant 0 : index
      %c0_17 = arith.constant 0 : index
      %32 = vector.load %arg2[%31, %c0_15, %c0_16, %c0_17] : memref<8x2x32x288xbf16, #tpu.memory_space<vmem>>, vector<1x1x32x288xbf16>
      %33 = vector.shape_cast %32 : vector<1x1x32x288xbf16> to vector<32x288xbf16>
      %34 = arith.index_cast %arg6 : i32 to index
      %c0_18 = arith.constant 0 : index
      %c0_19 = arith.constant 0 : index
      %c0_20 = arith.constant 0 : index
      %35 = vector.load %arg3[%34, %c0_18, %c0_19, %c0_20] : memref<8x2x32x1xf32, #tpu.memory_space<vmem>>, vector<1x1x32x1xf32>
      %36 = vector.shape_cast %35 : vector<1x1x32x1xf32> to vector<32x1xf32>
      %37 = arith.truncf %arg7 : vector<32x256xf32> to vector<32x256xbf16>
      %c0_21 = arith.constant 0 : index
      %c128 = arith.constant 128 : index
      %38 = vector.load %arg5[%c0_21, %c128] : memref<32x512xbf16, #tpu.memory_space<vmem>>, vector<32x256xbf16>
      tpu.vector_store %arg5[%c0_21, %c128], %37 {strides = array<i32>} : memref<32x512xbf16, #tpu.memory_space<vmem>>, vector<32x256xbf16>,
      %c0_22 = arith.constant 0 : index
      %c111 = arith.constant 111 : index
      %39 = vector.load %arg5[%c0_22, %c111] : memref<32x512xbf16, #tpu.memory_space<vmem>>, vector<32x256xbf16>
      %cst_23 = arith.constant 0.000000e+00 : bf16
      %40 = vector.broadcast %cst_23 : bf16 to vector<32x256xbf16>
      %41 = vector.shape_cast %21 : vector<1x256xi1> to vector<1x256xi1>
      %42 = vector.broadcast %41 : vector<1x256xi1> to vector<32x256xi1>
      %43 = arith.select %42, %39, %40 : vector<32x256xi1>, vector<32x256xbf16>
      %c0_24 = arith.constant 0 : index
      %c112 = arith.constant 112 : index
      %44 = vector.load %arg5[%c0_24, %c112] : memref<32x512xbf16, #tpu.memory_space<vmem>>, vector<32x256xbf16>
      %c0_25 = arith.constant 0 : index
      %c113 = arith.constant 113 : index
      %45 = vector.load %arg5[%c0_25, %c113] : memref<32x512xbf16, #tpu.memory_space<vmem>>, vector<32x256xbf16>
      %cst_26 = arith.constant 0.000000e+00 : bf16
      %46 = vector.broadcast %cst_26 : bf16 to vector<32x256xbf16>
      %47 = vector.shape_cast %23 : vector<1x256xi1> to vector<1x256xi1>
      %48 = vector.broadcast %47 : vector<1x256xi1> to vector<32x256xi1>
      %49 = arith.select %48, %45, %46 : vector<32x256xi1>, vector<32x256xbf16>
      %c0_27 = arith.constant 0 : index
      %c127 = arith.constant 127 : index
      %50 = vector.load %arg5[%c0_27, %c127] : memref<32x512xbf16, #tpu.memory_space<vmem>>, vector<32x256xbf16>
      %cst_28 = arith.constant 0.000000e+00 : bf16
      %51 = vector.broadcast %cst_28 : bf16 to vector<32x256xbf16>
      %52 = vector.shape_cast %21 : vector<1x256xi1> to vector<1x256xi1>
      %53 = vector.broadcast %52 : vector<1x256xi1> to vector<32x256xi1>
      %54 = arith.select %53, %50, %51 : vector<32x256xi1>, vector<32x256xbf16>
      %c0_29 = arith.constant 0 : index
      %c128_30 = arith.constant 128 : index
      %55 = vector.load %arg5[%c0_29, %c128_30] : memref<32x512xbf16, #tpu.memory_space<vmem>>, vector<32x256xbf16>
      %c0_31 = arith.constant 0 : index
      %c129 = arith.constant 129 : index
      %56 = vector.load %arg5[%c0_31, %c129] : memref<32x512xbf16, #tpu.memory_space<vmem>>, vector<32x256xbf16>
      %cst_32 = arith.constant 0.000000e+00 : bf16
      %57 = vector.broadcast %cst_32 : bf16 to vector<32x256xbf16>
      %58 = vector.shape_cast %23 : vector<1x256xi1> to vector<1x256xi1>
      %59 = vector.broadcast %58 : vector<1x256xi1> to vector<32x256xi1>
      %60 = arith.select %59, %56, %57 : vector<32x256xi1>, vector<32x256xbf16>
      %c0_33 = arith.constant 0 : index
      %c143 = arith.constant 143 : index
      %61 = vector.load %arg5[%c0_33, %c143] : memref<32x512xbf16, #tpu.memory_space<vmem>>, vector<32x256xbf16>
      %cst_34 = arith.constant 0.000000e+00 : bf16
      %62 = vector.broadcast %cst_34 : bf16 to vector<32x256xbf16>
      %63 = vector.shape_cast %21 : vector<1x256xi1> to vector<1x256xi1>
      %64 = vector.broadcast %63 : vector<1x256xi1> to vector<32x256xi1>
      %65 = arith.select %64, %61, %62 : vector<32x256xi1>, vector<32x256xbf16>
      %c0_35 = arith.constant 0 : index
      %c144 = arith.constant 144 : index
      %66 = vector.load %arg5[%c0_35, %c144] : memref<32x512xbf16, #tpu.memory_space<vmem>>, vector<32x256xbf16>
      %c0_36 = arith.constant 0 : index
      %c145 = arith.constant 145 : index
      %67 = vector.load %arg5[%c0_36, %c145] : memref<32x512xbf16, #tpu.memory_space<vmem>>, vector<32x256xbf16>
      %cst_37 = arith.constant 0.000000e+00 : bf16
      %68 = vector.broadcast %cst_37 : bf16 to vector<32x256xbf16>
      %69 = vector.shape_cast %23 : vector<1x256xi1> to vector<1x256xi1>
      %70 = vector.broadcast %69 : vector<1x256xi1> to vector<32x256xi1>
      %71 = arith.select %70, %67, %68 : vector<32x256xi1>, vector<32x256xbf16>
      %72 = tpu.concatenate %43, %44, %49, %54, %55, %60, %65, %66, %71 in 0 : vector<32x256xbf16>, vector<32x256xbf16>, vector<32x256xbf16>, vector<32x256xbf16>, vector<32x256xbf16>, vector<32x256xbf16>, vector<32x256xbf16>, vector<32x256xbf16>, vector<32x256xbf16> -> vector<288x256xbf16>
      %cst_38 = arith.constant dense<0.000000e+00> : vector<32x256xf32>
      %73 = tpu.matmul %33, %72, %cst_38 {dimension_numbers = #tpu.dot_dimension_numbers<[1], [0], [0], [1], [0, 0, 1, 1], [], []>} : vector<32x288xbf16>, vector<288x256xbf16>, vector<32x256xf32> -> vector<32x256xf32>
      %74 = vector.broadcast %36 : vector<32x1xf32> to vector<32x256xf32>
      %75 = arith.addf %73, %74 : vector<32x256xf32>
      %cst_39 = arith.constant 0.000000e+00 : f32
      %76 = vector.broadcast %cst_39 : f32 to vector<32x256xf32>
      %77 = arith.maximumf %75, %76 : vector<32x256xf32>
      %78 = arith.index_cast %arg6 : i32 to index
      %c1 = arith.constant 1 : index
      %c0_40 = arith.constant 0 : index
      %c0_41 = arith.constant 0 : index
      %79 = vector.load %arg2[%78, %c1, %c0_40, %c0_41] : memref<8x2x32x288xbf16, #tpu.memory_space<vmem>>, vector<1x1x32x288xbf16>
      %80 = vector.shape_cast %79 : vector<1x1x32x288xbf16> to vector<32x288xbf16>
      %81 = arith.index_cast %arg6 : i32 to index
      %c1_42 = arith.constant 1 : index
      %c0_43 = arith.constant 0 : index
      %c0_44 = arith.constant 0 : index
      %82 = vector.load %arg3[%81, %c1_42, %c0_43, %c0_44] : memref<8x2x32x1xf32, #tpu.memory_space<vmem>>, vector<1x1x32x1xf32>
      %83 = vector.shape_cast %82 : vector<1x1x32x1xf32> to vector<32x1xf32>
      %84 = arith.truncf %77 : vector<32x256xf32> to vector<32x256xbf16>
      %c0_45 = arith.constant 0 : index
      %c128_46 = arith.constant 128 : index
      %85 = vector.load %arg5[%c0_45, %c128_46] : memref<32x512xbf16, #tpu.memory_space<vmem>>, vector<32x256xbf16>
      tpu.vector_store %arg5[%c0_45, %c128_46], %84 {strides = array<i32>} : memref<32x512xbf16, #tpu.memory_space<vmem>>, vector<32x256xbf16>,
      %c0_47 = arith.constant 0 : index
      %c111_48 = arith.constant 111 : index
      %86 = vector.load %arg5[%c0_47, %c111_48] : memref<32x512xbf16, #tpu.memory_space<vmem>>, vector<32x256xbf16>
      %cst_49 = arith.constant 0.000000e+00 : bf16
      %87 = vector.broadcast %cst_49 : bf16 to vector<32x256xbf16>
      %88 = vector.shape_cast %21 : vector<1x256xi1> to vector<1x256xi1>
      %89 = vector.broadcast %88 : vector<1x256xi1> to vector<32x256xi1>
      %90 = arith.select %89, %86, %87 : vector<32x256xi1>, vector<32x256xbf16>
      %c0_50 = arith.constant 0 : index
      %c112_51 = arith.constant 112 : index
      %91 = vector.load %arg5[%c0_50, %c112_51] : memref<32x512xbf16, #tpu.memory_space<vmem>>, vector<32x256xbf16>
      %c0_52 = arith.constant 0 : index
      %c113_53 = arith.constant 113 : index
      %92 = vector.load %arg5[%c0_52, %c113_53] : memref<32x512xbf16, #tpu.memory_space<vmem>>, vector<32x256xbf16>
      %cst_54 = arith.constant 0.000000e+00 : bf16
      %93 = vector.broadcast %cst_54 : bf16 to vector<32x256xbf16>
      %94 = vector.shape_cast %23 : vector<1x256xi1> to vector<1x256xi1>
      %95 = vector.broadcast %94 : vector<1x256xi1> to vector<32x256xi1>
      %96 = arith.select %95, %92, %93 : vector<32x256xi1>, vector<32x256xbf16>
      %c0_55 = arith.constant 0 : index
      %c127_56 = arith.constant 127 : index
      %97 = vector.load %arg5[%c0_55, %c127_56] : memref<32x512xbf16, #tpu.memory_space<vmem>>, vector<32x256xbf16>
      %cst_57 = arith.constant 0.000000e+00 : bf16
      %98 = vector.broadcast %cst_57 : bf16 to vector<32x256xbf16>
      %99 = vector.shape_cast %21 : vector<1x256xi1> to vector<1x256xi1>
      %100 = vector.broadcast %99 : vector<1x256xi1> to vector<32x256xi1>
      %101 = arith.select %100, %97, %98 : vector<32x256xi1>, vector<32x256xbf16>
      %c0_58 = arith.constant 0 : index
      %c128_59 = arith.constant 128 : index
      %102 = vector.load %arg5[%c0_58, %c128_59] : memref<32x512xbf16, #tpu.memory_space<vmem>>, vector<32x256xbf16>
      %c0_60 = arith.constant 0 : index
      %c129_61 = arith.constant 129 : index
      %103 = vector.load %arg5[%c0_60, %c129_61] : memref<32x512xbf16, #tpu.memory_space<vmem>>, vector<32x256xbf16>
      %cst_62 = arith.constant 0.000000e+00 : bf16
      %104 = vector.broadcast %cst_62 : bf16 to vector<32x256xbf16>
      %105 = vector.shape_cast %23 : vector<1x256xi1> to vector<1x256xi1>
      %106 = vector.broadcast %105 : vector<1x256xi1> to vector<32x256xi1>
      %107 = arith.select %106, %103, %104 : vector<32x256xi1>, vector<32x256xbf16>
      %c0_63 = arith.constant 0 : index
      %c143_64 = arith.constant 143 : index
      %108 = vector.load %arg5[%c0_63, %c143_64] : memref<32x512xbf16, #tpu.memory_space<vmem>>, vector<32x256xbf16>
      %cst_65 = arith.constant 0.000000e+00 : bf16
      %109 = vector.broadcast %cst_65 : bf16 to vector<32x256xbf16>
      %110 = vector.shape_cast %21 : vector<1x256xi1> to vector<1x256xi1>
      %111 = vector.broadcast %110 : vector<1x256xi1> to vector<32x256xi1>
      %112 = arith.select %111, %108, %109 : vector<32x256xi1>, vector<32x256xbf16>
      %c0_66 = arith.constant 0 : index
      %c144_67 = arith.constant 144 : index
      %113 = vector.load %arg5[%c0_66, %c144_67] : memref<32x512xbf16, #tpu.memory_space<vmem>>, vector<32x256xbf16>
      %c0_68 = arith.constant 0 : index
      %c145_69 = arith.constant 145 : index
      %114 = vector.load %arg5[%c0_68, %c145_69] : memref<32x512xbf16, #tpu.memory_space<vmem>>, vector<32x256xbf16>
      %cst_70 = arith.constant 0.000000e+00 : bf16
      %115 = vector.broadcast %cst_70 : bf16 to vector<32x256xbf16>
      %116 = vector.shape_cast %23 : vector<1x256xi1> to vector<1x256xi1>
      %117 = vector.broadcast %116 : vector<1x256xi1> to vector<32x256xi1>
      %118 = arith.select %117, %114, %115 : vector<32x256xi1>, vector<32x256xbf16>
      %119 = tpu.concatenate %90, %91, %96, %101, %102, %107, %112, %113, %118 in 0 : vector<32x256xbf16>, vector<32x256xbf16>, vector<32x256xbf16>, vector<32x256xbf16>, vector<32x256xbf16>, vector<32x256xbf16>, vector<32x256xbf16>, vector<32x256xbf16>, vector<32x256xbf16> -> vector<288x256xbf16>
      %cst_71 = arith.constant dense<0.000000e+00> : vector<32x256xf32>
      %120 = tpu.matmul %80, %119, %cst_71 {dimension_numbers = #tpu.dot_dimension_numbers<[1], [0], [0], [1], [0, 0, 1, 1], [], []>} : vector<32x288xbf16>, vector<288x256xbf16>, vector<32x256xf32> -> vector<32x256xf32>
      %121 = vector.broadcast %83 : vector<32x1xf32> to vector<32x256xf32>
      %122 = arith.addf %120, %121 : vector<32x256xf32>
      %123 = arith.addf %arg7, %122 : vector<32x256xf32>
      scf.yield %123 : vector<32x256xf32>
    }
    %c8_i32_11 = arith.constant 8 : i32
    %c0_12 = arith.constant 0 : index
    %c0_13 = arith.constant 0 : index
    %c0_14 = arith.constant 0 : index
    %28 = vector.load %arg4[%c0_12, %c0_13, %c0_14] : memref<1x32x256xf32, #tpu.memory_space<vmem>>, vector<1x32x256xf32>
    %29 = vector.shape_cast %28 : vector<1x32x256xf32> to vector<32x256xf32>
    %30 = vector.shape_cast %27 : vector<32x256xf32> to vector<1x32x256xf32>
    tpu.vector_store %arg4[%c0_12, %c0_13, %c0_14], %30 {strides = array<i32>} : memref<1x32x256xf32, #tpu.memory_space<vmem>>, vector<1x32x256xf32>,
    return
  }
  func.func @transform_0(%arg0: i32) -> (i32, i32, i32) {
    %c0_i32 = arith.constant 0 : i32
    %c0_i32_0 = arith.constant 0 : i32
    %c0_i32_1 = arith.constant 0 : i32
    return %arg0, %c0_i32, %c0_i32_0 : i32, i32, i32
  }
  func.func @transform_1(%arg0: i32) -> (i32, i32, i32, i32) {
    %c0_i32 = arith.constant 0 : i32
    %c0_i32_0 = arith.constant 0 : i32
    %c0_i32_1 = arith.constant 0 : i32
    %c0_i32_2 = arith.constant 0 : i32
    %c0_i32_3 = arith.constant 0 : i32
    return %c0_i32, %c0_i32_0, %c0_i32_1, %c0_i32_2 : i32, i32, i32, i32
  }
  func.func @transform_2(%arg0: i32) -> (i32, i32, i32, i32) {
    %c0_i32 = arith.constant 0 : i32
    %c0_i32_0 = arith.constant 0 : i32
    %c0_i32_1 = arith.constant 0 : i32
    %c0_i32_2 = arith.constant 0 : i32
    %c0_i32_3 = arith.constant 0 : i32
    return %c0_i32, %c0_i32_0, %c0_i32_1, %c0_i32_2 : i32, i32, i32, i32
  }
  func.func @transform_3(%arg0: i32) -> (i32, i32, i32) {
    %c0_i32 = arith.constant 0 : i32
    %c0_i32_0 = arith.constant 0 : i32
    %c0_i32_1 = arith.constant 0 : i32
    return %arg0, %c0_i32, %c0_i32_0 : i32, i32, i32
  }
}

</mosaic_0001>

<llo_original>
// kernel: tpu_custom_call.1
$region0: #{tpu_custom_call.1}
  #allocation0 [shape = 'u32[]', space=smem, size = 0x4, offset = 0x4, fixed_abs, tag = 'smem constant byte address 0x4 - core index']
  #allocation1 [shape = 'u32[144,128]{1,0:T(1,128)}', space=vmem, size = 0x12000, scoped, tag = 'internal scratch']
  #allocation2 [shape = 'bf16[32,512]{1,0:T(16,128)(2,1)}', space=vmem, size = 0x8000, scoped, tag = 'scratch operand']
  %s0 = inlined_call_operand.vmem [shape: f32[2,32,256], index: 0, kind: input, shape index: {}]
  %s1 = inlined_call_operand.hbm [shape: bf16[8,2,32,288], index: 1, kind: input, shape index: {}]
  %s2 = inlined_call_operand.vmem [shape: f32[8,2,32,1], index: 2, kind: input, shape index: {}]
  %s3 = inlined_call_operand.hbm [shape: f32[2,32,256], index: 3, kind: output, shape index: {}]
  %s4 = sld [smem:[#allocation0]]
  $region56: #{tpu_custom_call.1} parent=0
    _
  %s6 = ssub.s32 1, %s4
  %s7 = scalar_select 0, %s6, %s4
  $region1: #{tpu_custom_call.1} parent=0
    #allocation3 [shape = 'u8[393216]{0}', space=vmem, size = 0x60000, scoped, tag = 'input window, operand 1, single buffered']
    #allocation4 [shape = 's32[2]{0}', space=sflag, size = 0x8, scoped, tag = 'scoped memory for tpu_custom_call.1']
    #allocation5 [shape = 's32[2]{0}', space=sflag, size = 0x8, scoped, tag = 'scoped memory for tpu_custom_call.1']
    #allocation6 [shape = 'u8[65536]{0}', space=vmem, size = 0x10000, scoped, tag = 'output window, operand 0']
    %8 = vsyncpa [#allocation4], 0
    %9 = vsyncpa [#allocation5], 0
    %s10 = scalar_lea.sflag [#allocation5], 1
    %11 = vsyncpa %s10, 0
    loop: start=0, step=1, limit=4
    $region2: #{tpu_custom_call.1} parent=1 // loop_pre_header
      _
    $region3: #{tpu_custom_call.1} parent=1 // loop_header
      %s13 = sphi 0, %s17
      %p14 = scmp.ge.s32.totalorder %s13, 4
      %s23 = sphi 0, %s25
      %s26 = sphi 0, %s23
      %s27 = sphi 0, %s26
      %s43 = sphi 0, %s27
      %s47 = sphi 0, %s47
      %s49 = sphi 0, %s47
      %s50 = sphi 0, %s49
      %s64 = sphi 0, %s50
      %s68 = sphi 0, %s68
      %s70 = sphi 0, %s68
      %s71 = sphi 0, %s70
      %s85 = sphi 0, %s71
      %s91 = sphi 0, %s93
      %s94 = sphi 0, %s91
      %s95 = sphi 0, %s94
      %s111 = sphi 0, %s95
    $region4: #{tpu_custom_call.1} parent=1 // loop_header_branch
      %16 = sbr.rel (%p14) target = $region8
    $region5: #{tpu_custom_call.1} parent=1 // loop_body
      %s18 = ssub.s32 %s13, 1
      %s19 = ssub.s32 %s13, 2
      %s20 = sadd.s32 %s13, 1
      %s21 = ssub.s32 %s13, %s20
      %p22 = scmp.eq.s32.totalorder %s21, 0
      %s24 = sadd.s32 %s23, 1
      %s25 = scalar_select %p22, %s23, %s24
      %p28 = pneg %p22
      %p29 = scmp.eq.s32.totalorder %s13, 1
      %p30 = por %p28, %p29
      %p31 = scmp.ne.s32.totalorder %s23, %s26
      %p32 = scmp.eq.s32.totalorder %s13, 0
      %p33 = por %p31, %p32
      %p34 = scmp.ne.s32.totalorder %s23, %s26
      %p35 = scmp.eq.s32.totalorder %s18, 1
      %p36 = por %p34, %p35
      %p37 = scmp.ne.s32.totalorder %s26, %s27
      %p38 = scmp.eq.s32.totalorder %s18, 0
      %p39 = por %p37, %p38
      %p40 = scmp.ne.s32.totalorder %s26, %s27
      %p41 = scmp.eq.s32.totalorder %s19, 1
      %p42 = por %p40, %p41
      %p44 = scmp.ne.s32.totalorder %s27, %s43
      %p45 = scmp.eq.s32.totalorder %s19, 0
      %p46 = por %p44, %p45
      %s48 = sadd.s32 %s47, 1
      %p51 = scmp.eq.s32.totalorder %s13, 1
      %p52 = scmp.ne.s32.totalorder %s47, %s49
      %p53 = scmp.eq.s32.totalorder %s13, 0
      %p54 = por %p52, %p53
      %p55 = scmp.ne.s32.totalorder %s47, %s49
      %p56 = scmp.eq.s32.totalorder %s18, 1
      %p57 = por %p55, %p56
      %p58 = scmp.ne.s32.totalorder %s49, %s50
      %p59 = scmp.eq.s32.totalorder %s18, 0
      %p60 = por %p58, %p59
      %p61 = scmp.ne.s32.totalorder %s49, %s50
      %p62 = scmp.eq.s32.totalorder %s19, 1
      %p63 = por %p61, %p62
      %p65 = scmp.ne.s32.totalorder %s50, %s64
      %p66 = scmp.eq.s32.totalorder %s19, 0
      %p67 = por %p65, %p66
      %s69 = sadd.s32 %s68, 1
      %p72 = scmp.eq.s32.totalorder %s13, 1
      %p73 = scmp.ne.s32.totalorder %s68, %s70
      %p74 = scmp.eq.s32.totalorder %s13, 0
      %p75 = por %p73, %p74
      %p76 = scmp.ne.s32.totalorder %s68, %s70
      %p77 = scmp.eq.s32.totalorder %s18, 1
      %p78 = por %p76, %p77
      %p79 = scmp.ne.s32.totalorder %s70, %s71
      %p80 = scmp.eq.s32.totalorder %s18, 0
      %p81 = por %p79, %p80
      %p82 = scmp.ne.s32.totalorder %s70, %s71
      %p83 = scmp.eq.s32.totalorder %s19, 1
      %p84 = por %p82, %p83
      %p86 = scmp.ne.s32.totalorder %s71, %s85
      %p87 = scmp.eq.s32.totalorder %s19, 0
      %p88 = por %p86, %p87
      %s89 = ssub.s32 %s13, %s20
      %p90 = scmp.eq.s32.totalorder %s89, 0
      %s92 = sadd.s32 %s91, 1
      %s93 = scalar_select %p90, %s91, %s92
      %p96 = pneg %p90
      %p97 = scmp.eq.s32.totalorder %s13, 1
      %p98 = por %p96, %p97
      %p99 = scmp.ne.s32.totalorder %s91, %s94
      %p100 = scmp.eq.s32.totalorder %s13, 0
      %p101 = por %p99, %p100
      %p102 = scmp.ne.s32.totalorder %s91, %s94
      %p103 = scmp.eq.s32.totalorder %s18, 1
      %p104 = por %p102, %p103
      %p105 = scmp.ne.s32.totalorder %s94, %s95
      %p106 = scmp.eq.s32.totalorder %s18, 0
      %p107 = por %p105, %p106
      %p108 = scmp.ne.s32.totalorder %s94, %s95
      %p109 = scmp.eq.s32.totalorder %s19, 1
      %p110 = por %p108, %p109
      %p112 = scmp.ne.s32.totalorder %s95, %s111
      %p113 = scmp.eq.s32.totalorder %s19, 0
      %p114 = por %p112, %p113
      %p115 = scmp.le.s32.totalorder 1, %s13
      %p116 = scmp.lt.s32.totalorder %s13, 3
      %p117 = pnand %p115, %p116
      %p118 = pneg %p117
      // Predicated region
      $region9: #{tpu_custom_call.1} parent=5 // pred_check
        _
      $region10: #{tpu_custom_call.1} parent=5 // pred_check_branch
        %120 = sbr.rel (%p117) target = $region12
      $region11: #{tpu_custom_call.1} parent=5 // pred_region
        %s121 = ssub.s32 %s13, 1
        // Predicated region
        $region13: #{tpu_custom_call.1} parent=11 // pred_check
          %p122 = pneg %p60
        $region14: #{tpu_custom_call.1} parent=11 // pred_check_branch
          %124 = sbr.rel (%p122) target = $region16
        $region15: #{tpu_custom_call.1} parent=11 // pred_region
          %s126 = ssub.s32 12288, 12288
          %127 = vsyncadd [#allocation4], %s126
          %s128 = sshll.u32 [#allocation3], 4
          %s129 = int_to_ptr.vmem [resolvable:$true] %s128
          %134 = dma.hbm_to_vmem [thread:$0]  %s1, 12288, %s129, [#allocation4], 192, 192, 12
        $region16: #{tpu_custom_call.1} parent=11 // pred_fallthru
          _
        // Predicated region
        $region17: #{tpu_custom_call.1} parent=11 // pred_check
          %p135 = pneg %p81
        $region18: #{tpu_custom_call.1} parent=11 // pred_check_branch
          %137 = sbr.rel (%p135) target = $region20
        $region19: #{tpu_custom_call.1} parent=11 // pred_region
          _
        $region20: #{tpu_custom_call.1} parent=11 // pred_fallthru
          _
      $region12: #{tpu_custom_call.1} parent=5 // pred_fallthru
        _
      %p138 = scmp.lt.s32.totalorder %s13, 2
      // Predicated region
      $region21: #{tpu_custom_call.1} parent=5 // pred_check
        %p139 = pneg %p138
      $region22: #{tpu_custom_call.1} parent=5 // pred_check_branch
        %141 = sbr.rel (%p139) target = $region24
      $region23: #{tpu_custom_call.1} parent=5 // pred_region
        // Predicated region
        $region25: #{tpu_custom_call.1} parent=23 // pred_check
          %p142 = pneg %p33
        $region26: #{tpu_custom_call.1} parent=23 // pred_check_branch
          %144 = sbr.rel (%p142) target = $region28
        $region27: #{tpu_custom_call.1} parent=23 // pred_region
          %p145 = scmp.lt.s32.totalorder %s13, 1
          %s146 = scalar_select %p145, %s13, 1
          %s147 = smul.addr %s146, 8
          %s148 = smul.addr %s147, 8
          %s149 = scalar_lea.vmem %s0, %s148
        $region28: #{tpu_custom_call.1} parent=23 // pred_fallthru
          _
      $region24: #{tpu_custom_call.1} parent=5 // pred_fallthru
        _
      %p150 = scmp.le.s32.totalorder 1, %s13
      %p151 = scmp.lt.s32.totalorder %s13, 3
      %p152 = pnand %p150, %p151
      %p153 = pneg %p152
      // Predicated region
      $region29: #{tpu_custom_call.1} parent=5 // pred_check
        _
      $region30: #{tpu_custom_call.1} parent=5 // pred_check_branch
        %155 = sbr.rel (%p152) target = $region32
      $region31: #{tpu_custom_call.1} parent=5 // pred_region
        %s156 = ssub.s32 %s13, 1
        // Predicated region
        $region33: #{tpu_custom_call.1} parent=31 // pred_check
          %p157 = pneg %p60
        $region34: #{tpu_custom_call.1} parent=31 // pred_check_branch
          %159 = sbr.rel (%p157) target = $region36
        $region35: #{tpu_custom_call.1} parent=31 // pred_region
          %160 = dma.done [#allocation4], 12288
        $region36: #{tpu_custom_call.1} parent=31 // pred_fallthru
          _
        %p161 = scmp.lt.s32.totalorder %s18, 1
        %s162 = scalar_select %p161, %s18, 1
        %s163 = smul.addr %s162, 8
        %s164 = smul.addr %s163, 8
        %s165 = scalar_lea.vmem %s0, %s164
        %p166 = pneg %p39
        %p167 = pneg %p36
        %p168 = pneg %p60
        %p169 = pneg %p57
        %p170 = pneg %p81
        %p171 = pneg %p78
        %p172 = pneg %p107
        %p173 = pneg %p104
        %s174 = sand.u32 %s94, 1
        %s175 = scalar_lea.sflag [#allocation5], %s174
        %s176 = sand.u32 %s94, 1
        %s177 = smul.addr %s176, 64
        %s178 = scalar_lea.vmem [#allocation6], %s177
        %p179 = scmp.lt.s32.totalorder %s18, 1
        %s180 = scalar_select %p179, %s18, 1
        %s181 = smul.addr %s180, 8
        %s182 = smul.addr %s181, 8
        %s183 = scalar_lea.vmem %s0, %s182
        %187 = vst [vmem:[#allocation2] sm:$0xff] 0
        %188 = vst [vmem:[#allocation2 + $0x20] sm:$0xff] 0
        %189 = vst [vmem:[#allocation2 + $0x18] sm:$0xff] 0
        %190 = vst [vmem:[#allocation2 + $0x38] sm:$0xff] 0
        %v191 = vlaneseq
        %v192 = vand.u32 %v191, 127
        %v193 = vadd.s32 %v192, 128
        %vm194 = vcmp.lt.s32.totalorder %v192, 0
        %v195 = vsub.s32 0, %v192
        %v196 = vsel %vm194, %v195, %v192
        %v197 = vshrl.u32 %v196, 4
        %v198 = vand.u32 %v196, 15
        %v199 = vsub.s32 0, %v198
        %v200 = vsel %vm194, %v199, %v198
        %vm201 = vcmp.lt.s32.totalorder %v193, 0
        %v202 = vsub.s32 0, %v193
        %v203 = vsel %vm201, %v202, %v193
        %v204 = vshrl.u32 %v203, 4
        %v205 = vand.u32 %v203, 15
        %v206 = vsub.s32 0, %v205
        %v207 = vsel %vm201, %v206, %v205
        %vm208 = vcmp.ne.s32.totalorder %v200, 0
        %vm209 = vcmp.ne.s32.totalorder %v207, 0
        %vm210 = vcmp.lt.s32.totalorder %v200, 0
        %vm211 = vcmp.lt.s32.totalorder %v207, 0
        %vm212 = vmand %vm210, %vm208
        %vm213 = vmand %vm211, %vm209
        %v214 = vadd.s32 %v200, 16
        %v215 = vadd.s32 %v207, 16
        %v216 = vsel %vm212, %v214, %v200
        %v217 = vsel %vm213, %v215, %v207
        %vm218 = vcmp.ne.s32.totalorder %v216, 0
        %vm219 = vcmp.ne.s32.totalorder %v217, 0
        %vm220 = vcmp.ne.s32.totalorder %v216, 15
        %vm221 = vcmp.ne.s32.totalorder %v217, 15
        %v222 = vld [vmem:[%s183] sm:$0xff]
        %v223 = vld [vmem:[%s183 + $0x8] sm:$0xff]
        %v224 = vld [vmem:[%s183 + $0x10] sm:$0xff]
        %v225 = vld [vmem:[%s183 + $0x18] sm:$0xff]
        %v226 = vld [vmem:[%s183 + $0x20] sm:$0xff]
        %v227 = vld [vmem:[%s183 + $0x28] sm:$0xff]
        %v228 = vld [vmem:[%s183 + $0x30] sm:$0xff]
        %v229 = vld [vmem:[%s183 + $0x38] sm:$0xff]
        loop: start=0, step=1, limit=8
        $region37: #{tpu_custom_call.1} parent=31 // loop_pre_header
          _
        $region38: #{tpu_custom_call.1} parent=31 // loop_header
          %s231 = sphi 0, %s235
          %p232 = scmp.ge.s32.totalorder %s231, 8
          %v236 = vphi %v222, %v1511
          %v237 = vphi %v223, %v1512
          %v238 = vphi %v224, %v1513
          %v239 = vphi %v225, %v1514
          %v240 = vphi %v226, %v1515
          %v241 = vphi %v227, %v1516
          %v242 = vphi %v228, %v1517
          %v243 = vphi %v229, %v1518
        $region39: #{tpu_custom_call.1} parent=31 // loop_header_branch
          %234 = sbr.rel (%p232) target = $region43
        $region40: #{tpu_custom_call.1} parent=31 // loop_body
          %s244 = smul.u32 %s231, 24
          %s245 = smul.addr %s244, 4
          %s246 = scalar_lea.vmem [#allocation3], %s245
          %v247 = vld [vmem:[%s246] sm:$0xff]
          %v248 = vld [vmem:[%s246 + $0x8] sm:$0xf]
          %v249 = vld [vmem:[%s246 + $0xc] sm:$0xff]
          %v250 = vld [vmem:[%s246 + $0x14] sm:$0xf]
          %v251 = vld [vmem:[%s246 + $0x18] sm:$0xff]
          %v252 = vld [vmem:[%s246 + $0x20] sm:$0xf]
          %v253 = vld [vmem:[%s246 + $0x24] sm:$0xff]
          %v254 = vld [vmem:[%s246 + $0x2c] sm:$0xf]
          %s255 = smul.u32 %s231, 64
          %s256 = scalar_lea.vmem %s2, %s255
          %v257 = vld [vmem:[%s256] sm:$0xff]
          %v258 = vld [vmem:[%s256 + $0x8] sm:$0xff]
          %v259 = vld [vmem:[%s256 + $0x10] sm:$0xff]
          %v260 = vld [vmem:[%s256 + $0x18] sm:$0xff]
          %v261 = vpack.c.bf16 %v238, %v236
          %v262 = vpack.c.bf16 %v239, %v237
          %v263 = vpack.c.bf16 %v242, %v240
          %v264 = vpack.c.bf16 %v243, %v241
          %265 = vst [vmem:[#allocation2 + $0x8] sm:$0xff] %v261
          %266 = vst [vmem:[#allocation2 + $0x10] sm:$0xff] %v262
          %267 = vst [vmem:[#allocation2 + $0x28] sm:$0xff] %v263
          %268 = vst [vmem:[#allocation2 + $0x30] sm:$0xff] %v264
          %v269 = vld [vmem:[#allocation2] sm:$0xff]
          %v270 = vld [vmem:[#allocation2 + $0x8] sm:$0xff]
          %v271 = vld [vmem:[#allocation2 + $0x10] sm:$0xff]
          %v272 = vld [vmem:[#allocation2 + $0x20] sm:$0xff]
          %v273 = vld [vmem:[#allocation2 + $0x28] sm:$0xff]
          %v274 = vld [vmem:[#allocation2 + $0x30] sm:$0xff]
          %v275 = vsel %vm218, 1, 0
          %v276 = vsel %vm219, 1, 0
          %vm277 = vcmp.eq.s32.totalorder %v275, 1
          %vm278 = vcmp.eq.s32.totalorder %v276, 1
          %vm279 = vmpackc.low %vm278, %vm277
          %v280 = vsel %vm279, 65537, 0
          %v281 = vlaneseq
          %v282 = vshrl.u32 %v281, 7
          %v283 = vsub.s32 0, %v282
          %v284 = vrot.slane %v280, %v283
          %v285 = vlaneseq
          %v286 = vshrl.u32 %v285, 7
          %v287 = vsub.s32 4, %v286
          %v288 = vrot.slane %v280, %v287
          %289 = vrot.lane.b32.xlu0 %v284, 111
          %v290 = vpop.permute.xlu0 %289
          %291 = vrot.lane.b32.xlu0 %v288, 111
          %v292 = vpop.permute.xlu0 %291
          %vm293 = vcmask 908288
          %v294 = vsel %vm293, %v290, %v292
          %vm295 = vcmp.ne.s16.totalorder %v290, 0
          %vm296 = vcmp.ne.s16.totalorder %v294, 0
          %vm297 = vcmp.ne.s16.totalorder %v292, 0
          %v298 = vsel %vm295, %v269, 0
          %v299 = vsel %vm296, %v270, 0
          %v300 = vsel %vm297, %v271, 0
          %v301 = vsel %vm295, %v272, 0
          %v302 = vsel %vm296, %v273, 0
          %v303 = vsel %vm297, %v274, 0
          %v304 = vsel %vm220, 1, 0
          %v305 = vsel %vm221, 1, 0
          %vm306 = vcmp.eq.s32.totalorder %v304, 1
          %vm307 = vcmp.eq.s32.totalorder %v305, 1
          %vm308 = vmpackc.low %vm307, %vm306
          %v309 = vsel %vm308, 65537, 0
          %v310 = vlaneseq
          %v311 = vshrl.u32 %v310, 7
          %v312 = vsub.s32 0, %v311
          %v313 = vrot.slane %v309, %v312
          %v314 = vlaneseq
          %v315 = vshrl.u32 %v314, 7
          %v316 = vsub.s32 4, %v315
          %v317 = vrot.slane %v309, %v316
          %318 = vrot.lane.b32.xlu0 %v313, 113
          %v319 = vpop.permute.xlu0 %318
          %320 = vrot.lane.b32.xlu0 %v317, 113
          %v321 = vpop.permute.xlu0 %320
          %vm322 = vcmask 924672
          %v323 = vsel %vm322, %v319, %v321
          %vm324 = vcmp.ne.s16.totalorder %v319, 0
          %vm325 = vcmp.ne.s16.totalorder %v323, 0
          %vm326 = vcmp.ne.s16.totalorder %v321, 0
          %v327 = vsel %vm324, %v269, 0
          %v328 = vsel %vm325, %v270, 0
          %v329 = vsel %vm326, %v271, 0
          %v330 = vsel %vm324, %v272, 0
          %v331 = vsel %vm325, %v273, 0
          %v332 = vsel %vm326, %v274, 0
          %333 = vrot.lane.b32.xlu0 %v284, 127
          %v334 = vpop.permute.xlu0 %333
          %335 = vrot.lane.b32.xlu0 %v288, 127
          %v336 = vpop.permute.xlu0 %335
          %vm337 = vcmask 1039360
          %v338 = vsel %vm337, %v334, %v336
          %vm339 = vcmp.ne.s16.totalorder %v334, 0
          %vm340 = vcmp.ne.s16.totalorder %v338, 0
          %vm341 = vcmp.ne.s16.totalorder %v336, 0
          %v342 = vsel %vm339, %v269, 0
          %v343 = vsel %vm340, %v270, 0
          %v344 = vsel %vm341, %v271, 0
          %v345 = vsel %vm339, %v272, 0
          %v346 = vsel %vm340, %v273, 0
          %v347 = vsel %vm341, %v274, 0
          %v348 = vld [vmem:[#allocation2 + $0x8] sm:$0xff]
          %v349 = vld [vmem:[#allocation2 + $0x10] sm:$0xff]
          %v350 = vld [vmem:[#allocation2 + $0x18] sm:$0xff]
          %v351 = vld [vmem:[#allocation2 + $0x28] sm:$0xff]
          %v352 = vld [vmem:[#allocation2 + $0x30] sm:$0xff]
          %v353 = vld [vmem:[#allocation2 + $0x38] sm:$0xff]
          %354 = vrot.lane.b32.xlu0 %v313, 1
          %v355 = vpop.permute.xlu0 %354
          %356 = vrot.lane.b32.xlu0 %v317, 1
          %v357 = vpop.permute.xlu0 %356
          %vm358 = vcmask 7168
          %v359 = vsel %vm358, %v355, %v357
          %vm360 = vcmp.ne.s16.totalorder %v355, 0
          %vm361 = vcmp.ne.s16.totalorder %v359, 0
          %vm362 = vcmp.ne.s16.totalorder %v357, 0
          %v363 = vsel %vm360, %v348, 0
          %v364 = vsel %vm361, %v349, 0
          %v365 = vsel %vm362, %v350, 0
          %v366 = vsel %vm360, %v351, 0
          %v367 = vsel %vm361, %v352, 0
          %v368 = vsel %vm362, %v353, 0
          %369 = vrot.lane.b32.xlu0 %v284, 15
          %v370 = vpop.permute.xlu0 %369
          %371 = vrot.lane.b32.xlu0 %v288, 15
          %v372 = vpop.permute.xlu0 %371
          %vm373 = vcmask 121856
          %v374 = vsel %vm373, %v370, %v372
          %vm375 = vcmp.ne.s16.totalorder %v370, 0
          %vm376 = vcmp.ne.s16.totalorder %v374, 0
          %vm377 = vcmp.ne.s16.totalorder %v372, 0
          %v378 = vsel %vm375, %v348, 0
          %v379 = vsel %vm376, %v349, 0
          %v380 = vsel %vm377, %v350, 0
          %v381 = vsel %vm375, %v351, 0
          %v382 = vsel %vm376, %v352, 0
          %v383 = vsel %vm377, %v353, 0
          %384 = vrot.lane.b32.xlu0 %v313, 17
          %v385 = vpop.permute.xlu0 %384
          %386 = vrot.lane.b32.xlu0 %v317, 17
          %v387 = vpop.permute.xlu0 %386
          %vm388 = vcmask 138240
          %v389 = vsel %vm388, %v385, %v387
          %vm390 = vcmp.ne.s16.totalorder %v385, 0
          %vm391 = vcmp.ne.s16.totalorder %v389, 0
          %vm392 = vcmp.ne.s16.totalorder %v387, 0
          %v393 = vsel %vm390, %v348, 0
          %v394 = vsel %vm391, %v349, 0
          %v395 = vsel %vm392, %v350, 0
          %v396 = vsel %vm390, %v351, 0
          %v397 = vsel %vm391, %v352, 0
          %v398 = vsel %vm392, %v353, 0
          %405 = vrot.lane.b32.xlu0 %v269, 127
          %v406 = vpop.permute.xlu0 %405
          %407 = vrot.lane.b32.xlu0 %v270, 127
          %v408 = vpop.permute.xlu0 %407
          %409 = vrot.lane.b32.xlu0 %v271, 127
          %v410 = vpop.permute.xlu0 %409
          %411 = vrot.lane.b32.xlu0 %v272, 127
          %v412 = vpop.permute.xlu0 %411
          %413 = vrot.lane.b32.xlu0 %v273, 127
          %v414 = vpop.permute.xlu0 %413
          %415 = vrot.lane.b32.xlu0 %v274, 127
          %v416 = vpop.permute.xlu0 %415
          %v417 = vsel %vm337, %v406, %v408
          %v418 = vsel %vm337, %v408, %v410
          %v419 = vsel %vm337, %v412, %v414
          %v420 = vsel %vm337, %v414, %v416
          %427 = vrot.lane.b32.xlu0 %v327, 126
          %v428 = vpop.permute.xlu0 %427
          %429 = vrot.lane.b32.xlu0 %v328, 126
          %v430 = vpop.permute.xlu0 %429
          %431 = vrot.lane.b32.xlu0 %v329, 126
          %v432 = vpop.permute.xlu0 %431
          %433 = vrot.lane.b32.xlu0 %v330, 126
          %v434 = vpop.permute.xlu0 %433
          %435 = vrot.lane.b32.xlu0 %v331, 126
          %v436 = vpop.permute.xlu0 %435
          %437 = vrot.lane.b32.xlu0 %v332, 126
          %v438 = vpop.permute.xlu0 %437
          %vm439 = vcmask 1031168
          %v440 = vsel %vm439, %v428, %v430
          %v441 = vsel %vm439, %v430, %v432
          %v442 = vsel %vm439, %v434, %v436
          %v443 = vsel %vm439, %v436, %v438
          %450 = vrot.lane.b32.xlu0 %v342, 112
          %v451 = vpop.permute.xlu0 %450
          %452 = vrot.lane.b32.xlu0 %v343, 112
          %v453 = vpop.permute.xlu0 %452
          %454 = vrot.lane.b32.xlu0 %v344, 112
          %v455 = vpop.permute.xlu0 %454
          %456 = vrot.lane.b32.xlu0 %v345, 112
          %v457 = vpop.permute.xlu0 %456
          %458 = vrot.lane.b32.xlu0 %v346, 112
          %v459 = vpop.permute.xlu0 %458
          %460 = vrot.lane.b32.xlu0 %v347, 112
          %v461 = vpop.permute.xlu0 %460
          %vm462 = vcmask 916480
          %v463 = vsel %vm462, %v451, %v453
          %v464 = vsel %vm462, %v453, %v455
          %v465 = vsel %vm462, %v457, %v459
          %v466 = vsel %vm462, %v459, %v461
          %467 = vrot.lane.b32.xlu0 %v270, 111
          %v468 = vpop.permute.xlu0 %467
          %469 = vrot.lane.b32.xlu0 %v271, 111
          %v470 = vpop.permute.xlu0 %469
          %471 = vrot.lane.b32.xlu0 %v273, 111
          %v472 = vpop.permute.xlu0 %471
          %473 = vrot.lane.b32.xlu0 %v274, 111
          %v474 = vpop.permute.xlu0 %473
          %v475 = vsel %vm293, %v468, %v470
          %v476 = vsel %vm293, %v472, %v474
          %483 = vrot.lane.b32.xlu0 %v363, 110
          %v484 = vpop.permute.xlu0 %483
          %485 = vrot.lane.b32.xlu0 %v364, 110
          %v486 = vpop.permute.xlu0 %485
          %487 = vrot.lane.b32.xlu0 %v365, 110
          %v488 = vpop.permute.xlu0 %487
          %489 = vrot.lane.b32.xlu0 %v366, 110
          %v490 = vpop.permute.xlu0 %489
          %491 = vrot.lane.b32.xlu0 %v367, 110
          %v492 = vpop.permute.xlu0 %491
          %493 = vrot.lane.b32.xlu0 %v368, 110
          %v494 = vpop.permute.xlu0 %493
          %vm495 = vcmask 900096
          %v496 = vsel %vm495, %v484, %v486
          %v497 = vsel %vm495, %v486, %v488
          %v498 = vsel %vm495, %v490, %v492
          %v499 = vsel %vm495, %v492, %v494
          %506 = vrot.lane.b32.xlu0 %v378, 96
          %v507 = vpop.permute.xlu0 %506
          %508 = vrot.lane.b32.xlu0 %v379, 96
          %v509 = vpop.permute.xlu0 %508
          %510 = vrot.lane.b32.xlu0 %v380, 96
          %v511 = vpop.permute.xlu0 %510
          %512 = vrot.lane.b32.xlu0 %v381, 96
          %v513 = vpop.permute.xlu0 %512
          %514 = vrot.lane.b32.xlu0 %v382, 96
          %v515 = vpop.permute.xlu0 %514
          %516 = vrot.lane.b32.xlu0 %v383, 96
          %v517 = vpop.permute.xlu0 %516
          %vm518 = vcmask 785408
          %v519 = vsel %vm518, %v507, %v509
          %v520 = vsel %vm518, %v509, %v511
          %v521 = vsel %vm518, %v513, %v515
          %v522 = vsel %vm518, %v515, %v517
          %529 = vrot.lane.b32.xlu0 %v348, 95
          %v530 = vpop.permute.xlu0 %529
          %531 = vrot.lane.b32.xlu0 %v349, 95
          %v532 = vpop.permute.xlu0 %531
          %533 = vrot.lane.b32.xlu0 %v350, 95
          %v534 = vpop.permute.xlu0 %533
          %535 = vrot.lane.b32.xlu0 %v351, 95
          %v536 = vpop.permute.xlu0 %535
          %537 = vrot.lane.b32.xlu0 %v352, 95
          %v538 = vpop.permute.xlu0 %537
          %539 = vrot.lane.b32.xlu0 %v353, 95
          %v540 = vpop.permute.xlu0 %539
          %vm541 = vcmask 777216
          %v542 = vsel %vm541, %v530, %v532
          %v543 = vsel %vm541, %v532, %v534
          %v544 = vsel %vm541, %v536, %v538
          %v545 = vsel %vm541, %v538, %v540
          %552 = vrot.lane.b32.xlu0 %v393, 94
          %v553 = vpop.permute.xlu0 %552
          %554 = vrot.lane.b32.xlu0 %v394, 94
          %v555 = vpop.permute.xlu0 %554
          %556 = vrot.lane.b32.xlu0 %v395, 94
          %v557 = vpop.permute.xlu0 %556
          %558 = vrot.lane.b32.xlu0 %v396, 94
          %v559 = vpop.permute.xlu0 %558
          %560 = vrot.lane.b32.xlu0 %v397, 94
          %v561 = vpop.permute.xlu0 %560
          %562 = vrot.lane.b32.xlu0 %v398, 94
          %v563 = vpop.permute.xlu0 %562
          %vm564 = vcmask 769024
          %v565 = vsel %vm564, %v553, %v555
          %v566 = vsel %vm564, %v555, %v557
          %v567 = vsel %vm564, %v559, %v561
          %v568 = vsel %vm564, %v561, %v563
          %570 = vset.pattern.permute.xlu0 0
          %571 = vperm.xlu0 %570, %v257
          %v572 = vpop.permute.xlu0 %571
          %575 = vset.pattern.permute.xlu0 0
          %576 = vperm.xlu0 %575, %v258
          %v577 = vpop.permute.xlu0 %576
          %580 = vset.pattern.permute.xlu0 0
          %581 = vperm.xlu0 %580, %v259
          %v582 = vpop.permute.xlu0 %581
          %585 = vset.pattern.permute.xlu0 0
          %586 = vperm.xlu0 %585, %v260
          %v587 = vpop.permute.xlu0 %586
          %v597 = vunpack.c.l.b16 %v247
          %v598 = vunpack.c.h.b16 %v247
          %v599 = vunpack.c.l.b16 %v248
          %v600 = vunpack.c.l.b16 %v249
          %v601 = vunpack.c.h.b16 %v249
          %v602 = vunpack.c.l.b16 %v250
          %v603 = vunpack.c.l.b16 %v251
          %v604 = vunpack.c.h.b16 %v251
          %v605 = vunpack.c.l.b16 %v252
          %v606 = vunpack.c.l.b16 %v253
          %v607 = vunpack.c.h.b16 %v253
          %v608 = vunpack.c.l.b16 %v254
          %v609 = vpack.c.b16 %v600, %v597
          %v610 = vpack.c.b16 %v601, %v598
          %v611 = vpack.c.b16 %v602, %v599
          %v612 = vpack.c.b16 %v606, %v603
          %v613 = vpack.c.b16 %v607, %v604
          %v614 = vpack.c.b16 %v608, %v605
          %625 = vrot.lane.b32.xlu0 %v298, 17
          %v626 = vpop.permute.xlu0 %625
          %627 = vrot.lane.b32.xlu0 %v299, 17
          %v628 = vpop.permute.xlu0 %627
          %629 = vrot.lane.b32.xlu0 %v300, 17
          %v630 = vpop.permute.xlu0 %629
          %631 = vrot.lane.b32.xlu0 %v301, 17
          %v632 = vpop.permute.xlu0 %631
          %633 = vrot.lane.b32.xlu0 %v302, 17
          %v634 = vpop.permute.xlu0 %633
          %635 = vrot.lane.b32.xlu0 %v303, 17
          %v636 = vpop.permute.xlu0 %635
          %637 = vrot.lane.b32.xlu0 %v417, 17
          %v638 = vpop.permute.xlu0 %637
          %639 = vrot.lane.b32.xlu0 %v418, 17
          %v640 = vpop.permute.xlu0 %639
          %641 = vrot.lane.b32.xlu0 %v410, 17
          %v642 = vpop.permute.xlu0 %641
          %643 = vrot.lane.b32.xlu0 %v419, 17
          %v644 = vpop.permute.xlu0 %643
          %645 = vrot.lane.b32.xlu0 %v420, 17
          %v646 = vpop.permute.xlu0 %645
          %647 = vrot.lane.b32.xlu0 %v416, 17
          %v648 = vpop.permute.xlu0 %647
          %649 = vrot.lane.b32.xlu0 %v440, 17
          %v650 = vpop.permute.xlu0 %649
          %651 = vrot.lane.b32.xlu0 %v441, 17
          %v652 = vpop.permute.xlu0 %651
          %653 = vrot.lane.b32.xlu0 %v432, 17
          %v654 = vpop.permute.xlu0 %653
          %655 = vrot.lane.b32.xlu0 %v442, 17
          %v656 = vpop.permute.xlu0 %655
          %657 = vrot.lane.b32.xlu0 %v443, 17
          %v658 = vpop.permute.xlu0 %657
          %659 = vrot.lane.b32.xlu0 %v438, 17
          %v660 = vpop.permute.xlu0 %659
          %661 = vrot.lane.b32.xlu0 %v463, 17
          %v662 = vpop.permute.xlu0 %661
          %663 = vrot.lane.b32.xlu0 %v464, 17
          %v664 = vpop.permute.xlu0 %663
          %665 = vrot.lane.b32.xlu0 %v455, 17
          %v666 = vpop.permute.xlu0 %665
          %667 = vrot.lane.b32.xlu0 %v465, 17
          %v668 = vpop.permute.xlu0 %667
          %669 = vrot.lane.b32.xlu0 %v466, 17
          %v670 = vpop.permute.xlu0 %669
          %671 = vrot.lane.b32.xlu0 %v461, 17
          %v672 = vpop.permute.xlu0 %671
          %673 = vrot.lane.b32.xlu0 %v468, 17
          %v674 = vpop.permute.xlu0 %673
          %675 = vrot.lane.b32.xlu0 %v475, 17
          %v676 = vpop.permute.xlu0 %675
          %677 = vrot.lane.b32.xlu0 %v470, 17
          %v678 = vpop.permute.xlu0 %677
          %679 = vrot.lane.b32.xlu0 %v472, 17
          %v680 = vpop.permute.xlu0 %679
          %681 = vrot.lane.b32.xlu0 %v476, 17
          %v682 = vpop.permute.xlu0 %681
          %683 = vrot.lane.b32.xlu0 %v474, 17
          %v684 = vpop.permute.xlu0 %683
          %685 = vrot.lane.b32.xlu0 %v484, 17
          %v686 = vpop.permute.xlu0 %685
          %687 = vrot.lane.b32.xlu0 %v496, 17
          %v688 = vpop.permute.xlu0 %687
          %689 = vrot.lane.b32.xlu0 %v497, 17
          %v690 = vpop.permute.xlu0 %689
          %691 = vrot.lane.b32.xlu0 %v490, 17
          %v692 = vpop.permute.xlu0 %691
          %693 = vrot.lane.b32.xlu0 %v498, 17
          %v694 = vpop.permute.xlu0 %693
          %695 = vrot.lane.b32.xlu0 %v499, 17
          %v696 = vpop.permute.xlu0 %695
          %697 = vrot.lane.b32.xlu0 %v507, 17
          %v698 = vpop.permute.xlu0 %697
          %699 = vrot.lane.b32.xlu0 %v519, 17
          %v700 = vpop.permute.xlu0 %699
          %701 = vrot.lane.b32.xlu0 %v520, 17
          %v702 = vpop.permute.xlu0 %701
          %703 = vrot.lane.b32.xlu0 %v513, 17
          %v704 = vpop.permute.xlu0 %703
          %705 = vrot.lane.b32.xlu0 %v521, 17
          %v706 = vpop.permute.xlu0 %705
          %707 = vrot.lane.b32.xlu0 %v522, 17
          %v708 = vpop.permute.xlu0 %707
          %709 = vrot.lane.b32.xlu0 %v530, 17
          %v710 = vpop.permute.xlu0 %709
          %711 = vrot.lane.b32.xlu0 %v542, 17
          %v712 = vpop.permute.xlu0 %711
          %713 = vrot.lane.b32.xlu0 %v543, 17
          %v714 = vpop.permute.xlu0 %713
          %715 = vrot.lane.b32.xlu0 %v536, 17
          %v716 = vpop.permute.xlu0 %715
          %717 = vrot.lane.b32.xlu0 %v544, 17
          %v718 = vpop.permute.xlu0 %717
          %719 = vrot.lane.b32.xlu0 %v545, 17
          %v720 = vpop.permute.xlu0 %719
          %721 = vrot.lane.b32.xlu0 %v553, 17
          %v722 = vpop.permute.xlu0 %721
          %723 = vrot.lane.b32.xlu0 %v565, 17
          %v724 = vpop.permute.xlu0 %723
          %725 = vrot.lane.b32.xlu0 %v566, 17
          %v726 = vpop.permute.xlu0 %725
          %727 = vrot.lane.b32.xlu0 %v559, 17
          %v728 = vpop.permute.xlu0 %727
          %729 = vrot.lane.b32.xlu0 %v567, 17
          %v730 = vpop.permute.xlu0 %729
          %731 = vrot.lane.b32.xlu0 %v568, 17
          %v732 = vpop.permute.xlu0 %731
          %v733 = vsel %vm388, %v626, %v628
          %v734 = vsel %vm388, %v628, %v630
          %v735 = vsel %vm388, %v632, %v634
          %v736 = vsel %vm388, %v634, %v636
          %v737 = vsel %vm388, %v638, %v640
          %v738 = vsel %vm388, %v640, %v642
          %v739 = vsel %vm388, %v644, %v646
          %v740 = vsel %vm388, %v646, %v648
          %v741 = vsel %vm388, %v650, %v652
          %v742 = vsel %vm388, %v652, %v654
          %v743 = vsel %vm388, %v656, %v658
          %v744 = vsel %vm388, %v658, %v660
          %v745 = vsel %vm388, %v662, %v664
          %v746 = vsel %vm388, %v664, %v666
          %v747 = vsel %vm388, %v668, %v670
          %v748 = vsel %vm388, %v670, %v672
          %v749 = vsel %vm388, %v674, %v676
          %v750 = vsel %vm388, %v676, %v678
          %v751 = vsel %vm388, %v680, %v682
          %v752 = vsel %vm388, %v682, %v684
          %v753 = vsel %vm388, %v686, %v688
          %v754 = vsel %vm388, %v688, %v690
          %v755 = vsel %vm388, %v692, %v694
          %v756 = vsel %vm388, %v694, %v696
          %v757 = vsel %vm388, %v698, %v700
          %v758 = vsel %vm388, %v700, %v702
          %v759 = vsel %vm388, %v704, %v706
          %v760 = vsel %vm388, %v706, %v708
          %v761 = vsel %vm388, %v710, %v712
          %v762 = vsel %vm388, %v712, %v714
          %v763 = vsel %vm388, %v716, %v718
          %v764 = vsel %vm388, %v718, %v720
          %v765 = vsel %vm388, %v722, %v724
          %v766 = vsel %vm388, %v724, %v726
          %v767 = vsel %vm388, %v728, %v730
          %v768 = vsel %vm388, %v730, %v732
          %vm805 = vcmask 261120
          %v807 = vsel %vm805, %v611, 0
          %v810 = vsel %vm805, %v614, 0
          %812 = vmatprep.subr.bf16.mxu0 %v734
          %813 = vmatpush1.bf16.msra.mxu0 %v733
          %814 = vmatprep.subr.bf16.mxu0 %v736
          %815 = vmatpush1.bf16.msra.mxu0 %v735
          %816 = vmatprep.subr.bf16.mxu0 %v738
          %817 = vmatpush1.bf16.msra.mxu0 %v737
          %818 = vmatprep.subr.bf16.mxu0 %v740
          %819 = vmatpush1.bf16.msra.mxu0 %v739
          %820 = vmatprep.subr.bf16.mxu0 %v742
          %821 = vmatpush1.bf16.msra.mxu0 %v741
          %822 = vmatprep.subr.bf16.mxu0 %v744
          %823 = vmatpush1.bf16.msra.mxu0 %v743
          %824 = vmatprep.subr.bf16.mxu0 %v746
          %825 = vmatpush1.bf16.msra.mxu0 %v745
          %826 = vmatprep.subr.bf16.mxu0 %v748
          %827 = vmatpush1.bf16.msra.mxu0 %v747
          %828 = vmatprep.subr.bf16.mxu0 %v750
          %829 = vmatpush1.bf16.msra.mxu0 %v749
          %830 = vmatprep.subr.bf16.mxu0 %v752
          %831 = vmatpush1.bf16.msra.mxu0 %v751
          %832 = vmatprep.subr.bf16.mxu0 %v754
          %833 = vmatpush1.bf16.msra.mxu0 %v753
          %834 = vmatprep.subr.bf16.mxu0 %v756
          %835 = vmatpush1.bf16.msra.mxu0 %v755
          %836 = vmatprep.subr.bf16.mxu0 %v758
          %837 = vmatpush1.bf16.msra.mxu0 %v757
          %838 = vmatprep.subr.bf16.mxu0 %v760
          %839 = vmatpush1.bf16.msra.mxu0 %v759
          %840 = vmatprep.subr.bf16.mxu0 %v762
          %841 = vmatpush1.bf16.msra.mxu0 %v761
          %842 = vmatprep.subr.bf16.mxu0 %v764
          %843 = vmatpush1.bf16.msra.mxu0 %v763
          %844 = vmatprep.mubr.bf16.mxu0 %v610
          %845 = vmatmul.mubr.bf16.gmra.mrb[0].mxu0 %v609
          %v846 = vpop.f32.mrb[0].mxu0
          %v847 = vadd.f32 %v572, %v846
          %v848 = vpop.f32.mrb[0].mxu0
          %v849 = vadd.f32 %v572, %v848
          %v850 = vpop.f32.mrb[0].mxu0
          %v851 = vadd.f32 %v577, %v850
          %v852 = vpop.f32.mrb[0].mxu0
          %v853 = vadd.f32 %v577, %v852
          %854 = vmatprep.mubr.bf16.mxu0 %v613
          %855 = vmatmul.mubr.bf16.gmra.mrb[0].mxu0 %v612
          %v856 = vpop.f32.mrb[0].mxu0
          %v857 = vadd.f32 %v582, %v856
          %v858 = vpop.f32.mrb[0].mxu0
          %v859 = vadd.f32 %v582, %v858
          %v860 = vpop.f32.mrb[0].mxu0
          %v861 = vadd.f32 %v587, %v860
          %v862 = vpop.f32.mrb[0].mxu0
          %v863 = vadd.f32 %v587, %v862
          %864 = vdwg.mxu0
          %865 = vmatprep.subr.bf16.mxu0 %v766
          %866 = vmatpush1.bf16.msra.mxu0 %v765
          %867 = vmatprep.subr.bf16.mxu0 %v768
          %868 = vmatpush1.bf16.msra.mxu0 %v767
          %869 = vmatprep.subr.bf16.mxu0 0
          %870 = vmatpush1.bf16.msra.mxu0 0
          %871 = vmatprep.subr.bf16.mxu0 0
          %872 = vmatpush1.bf16.msra.mxu0 0
          %873 = vmatprep.subr.bf16.mxu0 0
          %874 = vmatpush1.bf16.msra.mxu0 0
          %875 = vmatprep.subr.bf16.mxu0 0
          %876 = vmatpush1.bf16.msra.mxu0 0
          %877 = vmatprep.subr.bf16.mxu0 0
          %878 = vmatpush1.bf16.msra.mxu0 0
          %879 = vmatprep.subr.bf16.mxu0 0
          %880 = vmatpush1.bf16.msra.mxu0 0
          %881 = vmatprep.subr.bf16.mxu0 0
          %882 = vmatpush1.bf16.msra.mxu0 0
          %883 = vmatprep.subr.bf16.mxu0 0
          %884 = vmatpush1.bf16.msra.mxu0 0
          %885 = vmatprep.subr.bf16.mxu0 0
          %886 = vmatpush1.bf16.msra.mxu0 0
          %887 = vmatprep.subr.bf16.mxu0 0
          %888 = vmatpush1.bf16.msra.mxu0 0
          %889 = vmatprep.subr.bf16.mxu0 0
          %890 = vmatpush1.bf16.msra.mxu0 0
          %891 = vmatprep.subr.bf16.mxu0 0
          %892 = vmatpush1.bf16.msra.mxu0 0
          %893 = vmatprep.subr.bf16.mxu0 0
          %894 = vmatpush1.bf16.msra.mxu0 0
          %895 = vmatprep.subr.bf16.mxu0 0
          %896 = vmatpush1.bf16.msra.mxu0 0
          %897 = vmatprep.mubr.bf16.mxu0 0
          %898 = vmatmul.mubr.bf16.gmra.mrb[0].mxu0 %v807
          %v899 = vpop.f32.mrb[0].mxu0
          %v900 = vadd.f32 %v847, %v899
          %v901 = vpop.f32.mrb[0].mxu0
          %v902 = vadd.f32 %v849, %v901
          %v903 = vpop.f32.mrb[0].mxu0
          %v904 = vadd.f32 %v851, %v903
          %v905 = vpop.f32.mrb[0].mxu0
          %v906 = vadd.f32 %v853, %v905
          %907 = vmatprep.mubr.bf16.mxu0 0
          %908 = vmatmul.mubr.bf16.gmra.mrb[0].mxu0 %v810
          %v909 = vpop.f32.mrb[0].mxu0
          %v910 = vadd.f32 %v857, %v909
          %v911 = vpop.f32.mrb[0].mxu0
          %v912 = vadd.f32 %v859, %v911
          %v913 = vpop.f32.mrb[0].mxu0
          %v914 = vadd.f32 %v861, %v913
          %v915 = vpop.f32.mrb[0].mxu0
          %v916 = vadd.f32 %v863, %v915
          %917 = vdwg.mxu0
          %v918 = vmax.f32 %v900, 0.0
          %v919 = vmax.f32 %v902, 0.0
          %v920 = vmax.f32 %v904, 0.0
          %v921 = vmax.f32 %v906, 0.0
          %v922 = vmax.f32 %v910, 0.0
          %v923 = vmax.f32 %v912, 0.0
          %v924 = vmax.f32 %v914, 0.0
          %v925 = vmax.f32 %v916, 0.0
          %s926 = sadd.s32 12, %s244
          %s927 = smul.addr %s926, 4
          %s928 = scalar_lea.vmem [#allocation3], %s927
          %v929 = vld [vmem:[%s928] sm:$0xff]
          %v930 = vld [vmem:[%s928 + $0x8] sm:$0xf]
          %v931 = vld [vmem:[%s928 + $0xc] sm:$0xff]
          %v932 = vld [vmem:[%s928 + $0x14] sm:$0xf]
          %v933 = vld [vmem:[%s928 + $0x18] sm:$0xff]
          %v934 = vld [vmem:[%s928 + $0x20] sm:$0xf]
          %v935 = vld [vmem:[%s928 + $0x24] sm:$0xff]
          %v936 = vld [vmem:[%s928 + $0x2c] sm:$0xf]
          %s937 = sadd.s32 32, %s255
          %s938 = scalar_lea.vmem %s2, %s937
          %v939 = vld [vmem:[%s938] sm:$0xff]
          %v940 = vld [vmem:[%s938 + $0x8] sm:$0xff]
          %v941 = vld [vmem:[%s938 + $0x10] sm:$0xff]
          %v942 = vld [vmem:[%s938 + $0x18] sm:$0xff]
          %v943 = vpack.c.bf16 %v920, %v918
          %v944 = vpack.c.bf16 %v921, %v919
          %v945 = vpack.c.bf16 %v924, %v922
          %v946 = vpack.c.bf16 %v925, %v923
          %947 = vst [vmem:[#allocation2 + $0x8] sm:$0xff] %v943
          %948 = vst [vmem:[#allocation2 + $0x10] sm:$0xff] %v944
          %949 = vst [vmem:[#allocation2 + $0x28] sm:$0xff] %v945
          %950 = vst [vmem:[#allocation2 + $0x30] sm:$0xff] %v946
          %v951 = vld [vmem:[#allocation2] sm:$0xff]
          %v952 = vld [vmem:[#allocation2 + $0x8] sm:$0xff]
          %v953 = vld [vmem:[#allocation2 + $0x10] sm:$0xff]
          %v954 = vld [vmem:[#allocation2 + $0x20] sm:$0xff]
          %v955 = vld [vmem:[#allocation2 + $0x28] sm:$0xff]
          %v956 = vld [vmem:[#allocation2 + $0x30] sm:$0xff]
          %v957 = vsel %vm295, %v951, 0
          %v958 = vsel %vm296, %v952, 0
          %v959 = vsel %vm297, %v953, 0
          %v960 = vsel %vm295, %v954, 0
          %v961 = vsel %vm296, %v955, 0
          %v962 = vsel %vm297, %v956, 0
          %v963 = vsel %vm324, %v951, 0
          %v964 = vsel %vm325, %v952, 0
          %v965 = vsel %vm326, %v953, 0
          %v966 = vsel %vm324, %v954, 0
          %v967 = vsel %vm325, %v955, 0
          %v968 = vsel %vm326, %v956, 0
          %v969 = vsel %vm339, %v951, 0
          %v970 = vsel %vm340, %v952, 0
          %v971 = vsel %vm341, %v953, 0
          %v972 = vsel %vm339, %v954, 0
          %v973 = vsel %vm340, %v955, 0
          %v974 = vsel %vm341, %v956, 0
          %v975 = vld [vmem:[#allocation2 + $0x8] sm:$0xff]
          %v976 = vld [vmem:[#allocation2 + $0x10] sm:$0xff]
          %v977 = vld [vmem:[#allocation2 + $0x18] sm:$0xff]
          %v978 = vld [vmem:[#allocation2 + $0x28] sm:$0xff]
          %v979 = vld [vmem:[#allocation2 + $0x30] sm:$0xff]
          %v980 = vld [vmem:[#allocation2 + $0x38] sm:$0xff]
          %v981 = vsel %vm360, %v975, 0
          %v982 = vsel %vm361, %v976, 0
          %v983 = vsel %vm362, %v977, 0
          %v984 = vsel %vm360, %v978, 0
          %v985 = vsel %vm361, %v979, 0
          %v986 = vsel %vm362, %v980, 0
          %v987 = vsel %vm375, %v975, 0
          %v988 = vsel %vm376, %v976, 0
          %v989 = vsel %vm377, %v977, 0
          %v990 = vsel %vm375, %v978, 0
          %v991 = vsel %vm376, %v979, 0
          %v992 = vsel %vm377, %v980, 0
          %v993 = vsel %vm390, %v975, 0
          %v994 = vsel %vm391, %v976, 0
          %v995 = vsel %vm392, %v977, 0
          %v996 = vsel %vm390, %v978, 0
          %v997 = vsel %vm391, %v979, 0
          %v998 = vsel %vm392, %v980, 0
          %1005 = vrot.lane.b32.xlu0 %v951, 127
          %v1006 = vpop.permute.xlu0 %1005
          %1007 = vrot.lane.b32.xlu0 %v952, 127
          %v1008 = vpop.permute.xlu0 %1007
          %1009 = vrot.lane.b32.xlu0 %v953, 127
          %v1010 = vpop.permute.xlu0 %1009
          %1011 = vrot.lane.b32.xlu0 %v954, 127
          %v1012 = vpop.permute.xlu0 %1011
          %1013 = vrot.lane.b32.xlu0 %v955, 127
          %v1014 = vpop.permute.xlu0 %1013
          %1015 = vrot.lane.b32.xlu0 %v956, 127
          %v1016 = vpop.permute.xlu0 %1015
          %v1017 = vsel %vm337, %v1006, %v1008
          %v1018 = vsel %vm337, %v1008, %v1010
          %v1019 = vsel %vm337, %v1012, %v1014
          %v1020 = vsel %vm337, %v1014, %v1016
          %1027 = vrot.lane.b32.xlu0 %v963, 126
          %v1028 = vpop.permute.xlu0 %1027
          %1029 = vrot.lane.b32.xlu0 %v964, 126
          %v1030 = vpop.permute.xlu0 %1029
          %1031 = vrot.lane.b32.xlu0 %v965, 126
          %v1032 = vpop.permute.xlu0 %1031
          %1033 = vrot.lane.b32.xlu0 %v966, 126
          %v1034 = vpop.permute.xlu0 %1033
          %1035 = vrot.lane.b32.xlu0 %v967, 126
          %v1036 = vpop.permute.xlu0 %1035
          %1037 = vrot.lane.b32.xlu0 %v968, 126
          %v1038 = vpop.permute.xlu0 %1037
          %v1039 = vsel %vm439, %v1028, %v1030
          %v1040 = vsel %vm439, %v1030, %v1032
          %v1041 = vsel %vm439, %v1034, %v1036
          %v1042 = vsel %vm439, %v1036, %v1038
          %1049 = vrot.lane.b32.xlu0 %v969, 112
          %v1050 = vpop.permute.xlu0 %1049
          %1051 = vrot.lane.b32.xlu0 %v970, 112
          %v1052 = vpop.permute.xlu0 %1051
          %1053 = vrot.lane.b32.xlu0 %v971, 112
          %v1054 = vpop.permute.xlu0 %1053
          %1055 = vrot.lane.b32.xlu0 %v972, 112
          %v1056 = vpop.permute.xlu0 %1055
          %1057 = vrot.lane.b32.xlu0 %v973, 112
          %v1058 = vpop.permute.xlu0 %1057
          %1059 = vrot.lane.b32.xlu0 %v974, 112
          %v1060 = vpop.permute.xlu0 %1059
          %v1061 = vsel %vm462, %v1050, %v1052
          %v1062 = vsel %vm462, %v1052, %v1054
          %v1063 = vsel %vm462, %v1056, %v1058
          %v1064 = vsel %vm462, %v1058, %v1060
          %1065 = vrot.lane.b32.xlu0 %v952, 111
          %v1066 = vpop.permute.xlu0 %1065
          %1067 = vrot.lane.b32.xlu0 %v953, 111
          %v1068 = vpop.permute.xlu0 %1067
          %1069 = vrot.lane.b32.xlu0 %v955, 111
          %v1070 = vpop.permute.xlu0 %1069
          %1071 = vrot.lane.b32.xlu0 %v956, 111
          %v1072 = vpop.permute.xlu0 %1071
          %v1073 = vsel %vm293, %v1066, %v1068
          %v1074 = vsel %vm293, %v1070, %v1072
          %1081 = vrot.lane.b32.xlu0 %v981, 110
          %v1082 = vpop.permute.xlu0 %1081
          %1083 = vrot.lane.b32.xlu0 %v982, 110
          %v1084 = vpop.permute.xlu0 %1083
          %1085 = vrot.lane.b32.xlu0 %v983, 110
          %v1086 = vpop.permute.xlu0 %1085
          %1087 = vrot.lane.b32.xlu0 %v984, 110
          %v1088 = vpop.permute.xlu0 %1087
          %1089 = vrot.lane.b32.xlu0 %v985, 110
          %v1090 = vpop.permute.xlu0 %1089
          %1091 = vrot.lane.b32.xlu0 %v986, 110
          %v1092 = vpop.permute.xlu0 %1091
          %v1093 = vsel %vm495, %v1082, %v1084
          %v1094 = vsel %vm495, %v1084, %v1086
          %v1095 = vsel %vm495, %v1088, %v1090
          %v1096 = vsel %vm495, %v1090, %v1092
          %1103 = vrot.lane.b32.xlu0 %v987, 96
          %v1104 = vpop.permute.xlu0 %1103
          %1105 = vrot.lane.b32.xlu0 %v988, 96
          %v1106 = vpop.permute.xlu0 %1105
          %1107 = vrot.lane.b32.xlu0 %v989, 96
          %v1108 = vpop.permute.xlu0 %1107
          %1109 = vrot.lane.b32.xlu0 %v990, 96
          %v1110 = vpop.permute.xlu0 %1109
          %1111 = vrot.lane.b32.xlu0 %v991, 96
          %v1112 = vpop.permute.xlu0 %1111
          %1113 = vrot.lane.b32.xlu0 %v992, 96
          %v1114 = vpop.permute.xlu0 %1113
          %v1115 = vsel %vm518, %v1104, %v1106
          %v1116 = vsel %vm518, %v1106, %v1108
          %v1117 = vsel %vm518, %v1110, %v1112
          %v1118 = vsel %vm518, %v1112, %v1114
          %1125 = vrot.lane.b32.xlu0 %v975, 95
          %v1126 = vpop.permute.xlu0 %1125
          %1127 = vrot.lane.b32.xlu0 %v976, 95
          %v1128 = vpop.permute.xlu0 %1127
          %1129 = vrot.lane.b32.xlu0 %v977, 95
          %v1130 = vpop.permute.xlu0 %1129
          %1131 = vrot.lane.b32.xlu0 %v978, 95
          %v1132 = vpop.permute.xlu0 %1131
          %1133 = vrot.lane.b32.xlu0 %v979, 95
          %v1134 = vpop.permute.xlu0 %1133
          %1135 = vrot.lane.b32.xlu0 %v980, 95
          %v1136 = vpop.permute.xlu0 %1135
          %v1137 = vsel %vm541, %v1126, %v1128
          %v1138 = vsel %vm541, %v1128, %v1130
          %v1139 = vsel %vm541, %v1132, %v1134
          %v1140 = vsel %vm541, %v1134, %v1136
          %1147 = vrot.lane.b32.xlu0 %v993, 94
          %v1148 = vpop.permute.xlu0 %1147
          %1149 = vrot.lane.b32.xlu0 %v994, 94
          %v1150 = vpop.permute.xlu0 %1149
          %1151 = vrot.lane.b32.xlu0 %v995, 94
          %v1152 = vpop.permute.xlu0 %1151
          %1153 = vrot.lane.b32.xlu0 %v996, 94
          %v1154 = vpop.permute.xlu0 %1153
          %1155 = vrot.lane.b32.xlu0 %v997, 94
          %v1156 = vpop.permute.xlu0 %1155
          %1157 = vrot.lane.b32.xlu0 %v998, 94
          %v1158 = vpop.permute.xlu0 %1157
          %v1159 = vsel %vm564, %v1148, %v1150
          %v1160 = vsel %vm564, %v1150, %v1152
          %v1161 = vsel %vm564, %v1154, %v1156
          %v1162 = vsel %vm564, %v1156, %v1158
          %1164 = vset.pattern.permute.xlu0 0
          %1165 = vperm.xlu0 %1164, %v939
          %v1166 = vpop.permute.xlu0 %1165
          %1169 = vset.pattern.permute.xlu0 0
          %1170 = vperm.xlu0 %1169, %v940
          %v1171 = vpop.permute.xlu0 %1170
          %1174 = vset.pattern.permute.xlu0 0
          %1175 = vperm.xlu0 %1174, %v941
          %v1176 = vpop.permute.xlu0 %1175
          %1179 = vset.pattern.permute.xlu0 0
          %1180 = vperm.xlu0 %1179, %v942
          %v1181 = vpop.permute.xlu0 %1180
          %v1191 = vunpack.c.l.b16 %v929
          %v1192 = vunpack.c.h.b16 %v929
          %v1193 = vunpack.c.l.b16 %v930
          %v1194 = vunpack.c.l.b16 %v931
          %v1195 = vunpack.c.h.b16 %v931
          %v1196 = vunpack.c.l.b16 %v932
          %v1197 = vunpack.c.l.b16 %v933
          %v1198 = vunpack.c.h.b16 %v933
          %v1199 = vunpack.c.l.b16 %v934
          %v1200 = vunpack.c.l.b16 %v935
          %v1201 = vunpack.c.h.b16 %v935
          %v1202 = vunpack.c.l.b16 %v936
          %v1203 = vpack.c.b16 %v1194, %v1191
          %v1204 = vpack.c.b16 %v1195, %v1192
          %v1205 = vpack.c.b16 %v1196, %v1193
          %v1206 = vpack.c.b16 %v1200, %v1197
          %v1207 = vpack.c.b16 %v1201, %v1198
          %v1208 = vpack.c.b16 %v1202, %v1199
          %1219 = vrot.lane.b32.xlu0 %v957, 17
          %v1220 = vpop.permute.xlu0 %1219
          %1221 = vrot.lane.b32.xlu0 %v958, 17
          %v1222 = vpop.permute.xlu0 %1221
          %1223 = vrot.lane.b32.xlu0 %v959, 17
          %v1224 = vpop.permute.xlu0 %1223
          %1225 = vrot.lane.b32.xlu0 %v960, 17
          %v1226 = vpop.permute.xlu0 %1225
          %1227 = vrot.lane.b32.xlu0 %v961, 17
          %v1228 = vpop.permute.xlu0 %1227
          %1229 = vrot.lane.b32.xlu0 %v962, 17
          %v1230 = vpop.permute.xlu0 %1229
          %1231 = vrot.lane.b32.xlu0 %v1017, 17
          %v1232 = vpop.permute.xlu0 %1231
          %1233 = vrot.lane.b32.xlu0 %v1018, 17
          %v1234 = vpop.permute.xlu0 %1233
          %1235 = vrot.lane.b32.xlu0 %v1010, 17
          %v1236 = vpop.permute.xlu0 %1235
          %1237 = vrot.lane.b32.xlu0 %v1019, 17
          %v1238 = vpop.permute.xlu0 %1237
          %1239 = vrot.lane.b32.xlu0 %v1020, 17
          %v1240 = vpop.permute.xlu0 %1239
          %1241 = vrot.lane.b32.xlu0 %v1016, 17
          %v1242 = vpop.permute.xlu0 %1241
          %1243 = vrot.lane.b32.xlu0 %v1039, 17
          %v1244 = vpop.permute.xlu0 %1243
          %1245 = vrot.lane.b32.xlu0 %v1040, 17
          %v1246 = vpop.permute.xlu0 %1245
          %1247 = vrot.lane.b32.xlu0 %v1032, 17
          %v1248 = vpop.permute.xlu0 %1247
          %1249 = vrot.lane.b32.xlu0 %v1041, 17
          %v1250 = vpop.permute.xlu0 %1249
          %1251 = vrot.lane.b32.xlu0 %v1042, 17
          %v1252 = vpop.permute.xlu0 %1251
          %1253 = vrot.lane.b32.xlu0 %v1038, 17
          %v1254 = vpop.permute.xlu0 %1253
          %1255 = vrot.lane.b32.xlu0 %v1061, 17
          %v1256 = vpop.permute.xlu0 %1255
          %1257 = vrot.lane.b32.xlu0 %v1062, 17
          %v1258 = vpop.permute.xlu0 %1257
          %1259 = vrot.lane.b32.xlu0 %v1054, 17
          %v1260 = vpop.permute.xlu0 %1259
          %1261 = vrot.lane.b32.xlu0 %v1063, 17
          %v1262 = vpop.permute.xlu0 %1261
          %1263 = vrot.lane.b32.xlu0 %v1064, 17
          %v1264 = vpop.permute.xlu0 %1263
          %1265 = vrot.lane.b32.xlu0 %v1060, 17
          %v1266 = vpop.permute.xlu0 %1265
          %1267 = vrot.lane.b32.xlu0 %v1066, 17
          %v1268 = vpop.permute.xlu0 %1267
          %1269 = vrot.lane.b32.xlu0 %v1073, 17
          %v1270 = vpop.permute.xlu0 %1269
          %1271 = vrot.lane.b32.xlu0 %v1068, 17
          %v1272 = vpop.permute.xlu0 %1271
          %1273 = vrot.lane.b32.xlu0 %v1070, 17
          %v1274 = vpop.permute.xlu0 %1273
          %1275 = vrot.lane.b32.xlu0 %v1074, 17
          %v1276 = vpop.permute.xlu0 %1275
          %1277 = vrot.lane.b32.xlu0 %v1072, 17
          %v1278 = vpop.permute.xlu0 %1277
          %1279 = vrot.lane.b32.xlu0 %v1082, 17
          %v1280 = vpop.permute.xlu0 %1279
          %1281 = vrot.lane.b32.xlu0 %v1093, 17
          %v1282 = vpop.permute.xlu0 %1281
          %1283 = vrot.lane.b32.xlu0 %v1094, 17
          %v1284 = vpop.permute.xlu0 %1283
          %1285 = vrot.lane.b32.xlu0 %v1088, 17
          %v1286 = vpop.permute.xlu0 %1285
          %1287 = vrot.lane.b32.xlu0 %v1095, 17
          %v1288 = vpop.permute.xlu0 %1287
          %1289 = vrot.lane.b32.xlu0 %v1096, 17
          %v1290 = vpop.permute.xlu0 %1289
          %1291 = vrot.lane.b32.xlu0 %v1104, 17
          %v1292 = vpop.permute.xlu0 %1291
          %1293 = vrot.lane.b32.xlu0 %v1115, 17
          %v1294 = vpop.permute.xlu0 %1293
          %1295 = vrot.lane.b32.xlu0 %v1116, 17
          %v1296 = vpop.permute.xlu0 %1295
          %1297 = vrot.lane.b32.xlu0 %v1110, 17
          %v1298 = vpop.permute.xlu0 %1297
          %1299 = vrot.lane.b32.xlu0 %v1117, 17
          %v1300 = vpop.permute.xlu0 %1299
          %1301 = vrot.lane.b32.xlu0 %v1118, 17
          %v1302 = vpop.permute.xlu0 %1301
          %1303 = vrot.lane.b32.xlu0 %v1126, 17
          %v1304 = vpop.permute.xlu0 %1303
          %1305 = vrot.lane.b32.xlu0 %v1137, 17
          %v1306 = vpop.permute.xlu0 %1305
          %1307 = vrot.lane.b32.xlu0 %v1138, 17
          %v1308 = vpop.permute.xlu0 %1307
          %1309 = vrot.lane.b32.xlu0 %v1132, 17
          %v1310 = vpop.permute.xlu0 %1309
          %1311 = vrot.lane.b32.xlu0 %v1139, 17
          %v1312 = vpop.permute.xlu0 %1311
          %1313 = vrot.lane.b32.xlu0 %v1140, 17
          %v1314 = vpop.permute.xlu0 %1313
          %1315 = vrot.lane.b32.xlu0 %v1148, 17
          %v1316 = vpop.permute.xlu0 %1315
          %1317 = vrot.lane.b32.xlu0 %v1159, 17
          %v1318 = vpop.permute.xlu0 %1317
          %1319 = vrot.lane.b32.xlu0 %v1160, 17
          %v1320 = vpop.permute.xlu0 %1319
          %1321 = vrot.lane.b32.xlu0 %v1154, 17
          %v1322 = vpop.permute.xlu0 %1321
          %1323 = vrot.lane.b32.xlu0 %v1161, 17
          %v1324 = vpop.permute.xlu0 %1323
          %1325 = vrot.lane.b32.xlu0 %v1162, 17
          %v1326 = vpop.permute.xlu0 %1325
          %v1327 = vsel %vm388, %v1220, %v1222
          %v1328 = vsel %vm388, %v1222, %v1224
          %v1329 = vsel %vm388, %v1226, %v1228
          %v1330 = vsel %vm388, %v1228, %v1230
          %v1331 = vsel %vm388, %v1232, %v1234
          %v1332 = vsel %vm388, %v1234, %v1236
          %v1333 = vsel %vm388, %v1238, %v1240
          %v1334 = vsel %vm388, %v1240, %v1242
          %v1335 = vsel %vm388, %v1244, %v1246
          %v1336 = vsel %vm388, %v1246, %v1248
          %v1337 = vsel %vm388, %v1250, %v1252
          %v1338 = vsel %vm388, %v1252, %v1254
          %v1339 = vsel %vm388, %v1256, %v1258
          %v1340 = vsel %vm388, %v1258, %v1260
          %v1341 = vsel %vm388, %v1262, %v1264
          %v1342 = vsel %vm388, %v1264, %v1266
          %v1343 = vsel %vm388, %v1268, %v1270
          %v1344 = vsel %vm388, %v1270, %v1272
          %v1345 = vsel %vm388, %v1274, %v1276
          %v1346 = vsel %vm388, %v1276, %v1278
          %v1347 = vsel %vm388, %v1280, %v1282
          %v1348 = vsel %vm388, %v1282, %v1284
          %v1349 = vsel %vm388, %v1286, %v1288
          %v1350 = vsel %vm388, %v1288, %v1290
          %v1351 = vsel %vm388, %v1292, %v1294
          %v1352 = vsel %vm388, %v1294, %v1296
          %v1353 = vsel %vm388, %v1298, %v1300
          %v1354 = vsel %vm388, %v1300, %v1302
          %v1355 = vsel %vm388, %v1304, %v1306
          %v1356 = vsel %vm388, %v1306, %v1308
          %v1357 = vsel %vm388, %v1310, %v1312
          %v1358 = vsel %vm388, %v1312, %v1314
          %v1359 = vsel %vm388, %v1316, %v1318
          %v1360 = vsel %vm388, %v1318, %v1320
          %v1361 = vsel %vm388, %v1322, %v1324
          %v1362 = vsel %vm388, %v1324, %v1326
          %v1400 = vsel %vm805, %v1205, 0
          %v1403 = vsel %vm805, %v1208, 0
          %1405 = vmatprep.subr.bf16.mxu0 %v1328
          %1406 = vmatpush1.bf16.msra.mxu0 %v1327
          %1407 = vmatprep.subr.bf16.mxu0 %v1330
          %1408 = vmatpush1.bf16.msra.mxu0 %v1329
          %1409 = vmatprep.subr.bf16.mxu0 %v1332
          %1410 = vmatpush1.bf16.msra.mxu0 %v1331
          %1411 = vmatprep.subr.bf16.mxu0 %v1334
          %1412 = vmatpush1.bf16.msra.mxu0 %v1333
          %1413 = vmatprep.subr.bf16.mxu0 %v1336
          %1414 = vmatpush1.bf16.msra.mxu0 %v1335
          %1415 = vmatprep.subr.bf16.mxu0 %v1338
          %1416 = vmatpush1.bf16.msra.mxu0 %v1337
          %1417 = vmatprep.subr.bf16.mxu0 %v1340
          %1418 = vmatpush1.bf16.msra.mxu0 %v1339
          %1419 = vmatprep.subr.bf16.mxu0 %v1342
          %1420 = vmatpush1.bf16.msra.mxu0 %v1341
          %1421 = vmatprep.subr.bf16.mxu0 %v1344
          %1422 = vmatpush1.bf16.msra.mxu0 %v1343
          %1423 = vmatprep.subr.bf16.mxu0 %v1346
          %1424 = vmatpush1.bf16.msra.mxu0 %v1345
          %1425 = vmatprep.subr.bf16.mxu0 %v1348
          %1426 = vmatpush1.bf16.msra.mxu0 %v1347
          %1427 = vmatprep.subr.bf16.mxu0 %v1350
          %1428 = vmatpush1.bf16.msra.mxu0 %v1349
          %1429 = vmatprep.subr.bf16.mxu0 %v1352
          %1430 = vmatpush1.bf16.msra.mxu0 %v1351
          %1431 = vmatprep.subr.bf16.mxu0 %v1354
          %1432 = vmatpush1.bf16.msra.mxu0 %v1353
          %1433 = vmatprep.subr.bf16.mxu0 %v1356
          %1434 = vmatpush1.bf16.msra.mxu0 %v1355
          %1435 = vmatprep.subr.bf16.mxu0 %v1358
          %1436 = vmatpush1.bf16.msra.mxu0 %v1357
          %1437 = vmatprep.mubr.bf16.mxu0 %v1204
          %1438 = vmatmul.mubr.bf16.gmra.mrb[0].mxu0 %v1203
          %v1439 = vpop.f32.mrb[0].mxu0
          %v1440 = vadd.f32 %v1166, %v1439
          %v1441 = vpop.f32.mrb[0].mxu0
          %v1442 = vadd.f32 %v1166, %v1441
          %v1443 = vpop.f32.mrb[0].mxu0
          %v1444 = vadd.f32 %v1171, %v1443
          %v1445 = vpop.f32.mrb[0].mxu0
          %v1446 = vadd.f32 %v1171, %v1445
          %1447 = vmatprep.mubr.bf16.mxu0 %v1207
          %1448 = vmatmul.mubr.bf16.gmra.mrb[0].mxu0 %v1206
          %v1449 = vpop.f32.mrb[0].mxu0
          %v1450 = vadd.f32 %v1176, %v1449
          %v1451 = vpop.f32.mrb[0].mxu0
          %v1452 = vadd.f32 %v1176, %v1451
          %v1453 = vpop.f32.mrb[0].mxu0
          %v1454 = vadd.f32 %v1181, %v1453
          %v1455 = vpop.f32.mrb[0].mxu0
          %v1456 = vadd.f32 %v1181, %v1455
          %1457 = vdwg.mxu0
          %1458 = vmatprep.subr.bf16.mxu0 %v1360
          %1459 = vmatpush1.bf16.msra.mxu0 %v1359
          %1460 = vmatprep.subr.bf16.mxu0 %v1362
          %1461 = vmatpush1.bf16.msra.mxu0 %v1361
          %1462 = vmatprep.subr.bf16.mxu0 0
          %1463 = vmatpush1.bf16.msra.mxu0 0
          %1464 = vmatprep.subr.bf16.mxu0 0
          %1465 = vmatpush1.bf16.msra.mxu0 0
          %1466 = vmatprep.subr.bf16.mxu0 0
          %1467 = vmatpush1.bf16.msra.mxu0 0
          %1468 = vmatprep.subr.bf16.mxu0 0
          %1469 = vmatpush1.bf16.msra.mxu0 0
          %1470 = vmatprep.subr.bf16.mxu0 0
          %1471 = vmatpush1.bf16.msra.mxu0 0
          %1472 = vmatprep.subr.bf16.mxu0 0
          %1473 = vmatpush1.bf16.msra.mxu0 0
          %1474 = vmatprep.subr.bf16.mxu0 0
          %1475 = vmatpush1.bf16.msra.mxu0 0
          %1476 = vmatprep.subr.bf16.mxu0 0
          %1477 = vmatpush1.bf16.msra.mxu0 0
          %1478 = vmatprep.subr.bf16.mxu0 0
          %1479 = vmatpush1.bf16.msra.mxu0 0
          %1480 = vmatprep.subr.bf16.mxu0 0
          %1481 = vmatpush1.bf16.msra.mxu0 0
          %1482 = vmatprep.subr.bf16.mxu0 0
          %1483 = vmatpush1.bf16.msra.mxu0 0
          %1484 = vmatprep.subr.bf16.mxu0 0
          %1485 = vmatpush1.bf16.msra.mxu0 0
          %1486 = vmatprep.subr.bf16.mxu0 0
          %1487 = vmatpush1.bf16.msra.mxu0 0
          %1488 = vmatprep.subr.bf16.mxu0 0
          %1489 = vmatpush1.bf16.msra.mxu0 0
          %1490 = vmatprep.mubr.bf16.mxu0 0
          %1491 = vmatmul.mubr.bf16.gmra.mrb[0].mxu0 %v1400
          %v1492 = vpop.f32.mrb[0].mxu0
          %v1493 = vadd.f32 %v1440, %v1492
          %v1494 = vpop.f32.mrb[0].mxu0
          %v1495 = vadd.f32 %v1442, %v1494
          %v1496 = vpop.f32.mrb[0].mxu0
          %v1497 = vadd.f32 %v1444, %v1496
          %v1498 = vpop.f32.mrb[0].mxu0
          %v1499 = vadd.f32 %v1446, %v1498
          %1500 = vmatprep.mubr.bf16.mxu0 0
          %1501 = vmatmul.mubr.bf16.gmra.mrb[0].mxu0 %v1403
          %v1502 = vpop.f32.mrb[0].mxu0
          %v1503 = vadd.f32 %v1450, %v1502
          %v1504 = vpop.f32.mrb[0].mxu0
          %v1505 = vadd.f32 %v1452, %v1504
          %v1506 = vpop.f32.mrb[0].mxu0
          %v1507 = vadd.f32 %v1454, %v1506
          %v1508 = vpop.f32.mrb[0].mxu0
          %v1509 = vadd.f32 %v1456, %v1508
          %1510 = vdwg.mxu0
          %v1511 = vadd.f32 %v236, %v1493
          %v1512 = vadd.f32 %v237, %v1495
          %v1513 = vadd.f32 %v238, %v1497
          %v1514 = vadd.f32 %v239, %v1499
          %v1515 = vadd.f32 %v240, %v1503
          %v1516 = vadd.f32 %v241, %v1505
          %v1517 = vadd.f32 %v242, %v1507
          %v1518 = vadd.f32 %v243, %v1509
        $region41: #{tpu_custom_call.1} parent=31 // loop_footer
          %s235 = sadd.s32 1, %s231
        $region42: #{tpu_custom_call.1} parent=31 // loop_footer_branch
          %230 = sbr.rel target = $region38
        $region43: #{tpu_custom_call.1} parent=31 // loop_exit
          _
        %1519 = vst [vmem:[%s178] sm:$0xff] %v236
        %1520 = vst [vmem:[%s178 + $0x8] sm:$0xff] %v237
        %1521 = vst [vmem:[%s178 + $0x10] sm:$0xff] %v238
        %1522 = vst [vmem:[%s178 + $0x18] sm:$0xff] %v239
        %1523 = vst [vmem:[%s178 + $0x20] sm:$0xff] %v240
        %1524 = vst [vmem:[%s178 + $0x28] sm:$0xff] %v241
        %1525 = vst [vmem:[%s178 + $0x30] sm:$0xff] %v242
        %1526 = vst [vmem:[%s178 + $0x38] sm:$0xff] %v243
        %s1527 = sand.u32 %s94, 1
        %s1528 = scalar_lea.sflag [#allocation5], %s1527
        %s1529 = sand.u32 %s94, 1
        %s1530 = smul.addr %s1529, 64
        %s1531 = scalar_lea.vmem [#allocation6], %s1530
        // Predicated region
        $region44: #{tpu_custom_call.1} parent=31 // pred_check
          %p1532 = pneg %p104
        $region45: #{tpu_custom_call.1} parent=31 // pred_check_branch
          %1534 = sbr.rel (%p1532) target = $region47
        $region46: #{tpu_custom_call.1} parent=31 // pred_region
          %s1536 = ssub.s32 1024, 1024
          %1537 = vsyncadd %s1528, %s1536
          %s1538 = smul.addr %s18, 8
          %s1539 = smul.addr %s1538, 128
          %s1540 = scalar_lea.hbm %s3, %s1539
          %s1541 = sshll.u32 %s1531, 4
          %s1542 = int_to_ptr.vmem [resolvable:$true] %s1541
          %1547 = dma.vmem_to_hbm [thread:$0]  %s1542, 1024, %s1540, %s1528, 256, 256, 16
        $region47: #{tpu_custom_call.1} parent=31 // pred_fallthru
          _
      $region32: #{tpu_custom_call.1} parent=5 // pred_fallthru
        _
      %p1548 = scmp.le.s32.totalorder 2, %s13
      // Predicated region
      $region48: #{tpu_custom_call.1} parent=5 // pred_check
        %p1549 = pneg %p1548
      $region49: #{tpu_custom_call.1} parent=5 // pred_check_branch
        %1551 = sbr.rel (%p1549) target = $region51
      $region50: #{tpu_custom_call.1} parent=5 // pred_region
        %s1552 = ssub.s32 %s13, 2
        // Predicated region
        $region52: #{tpu_custom_call.1} parent=50 // pred_check
          %p1553 = pneg %p110
        $region53: #{tpu_custom_call.1} parent=50 // pred_check_branch
          %1555 = sbr.rel (%p1553) target = $region55
        $region54: #{tpu_custom_call.1} parent=50 // pred_region
          %s1556 = sand.u32 %s95, 1
          %s1557 = scalar_lea.sflag [#allocation5], %s1556
          %s1558 = sand.u32 %s95, 1
          %s1559 = smul.addr %s1558, 64
          %s1560 = scalar_lea.vmem [#allocation6], %s1559
          %1561 = dma.done %s1557, 1024
        $region55: #{tpu_custom_call.1} parent=50 // pred_fallthru
          _
      $region51: #{tpu_custom_call.1} parent=5 // pred_fallthru
        _
    $region6: #{tpu_custom_call.1} parent=1 // loop_footer
      %s17 = sadd.s32 1, %s13
    $region7: #{tpu_custom_call.1} parent=1 // loop_footer_branch
      %12 = sbr.rel target = $region3
    $region8: #{tpu_custom_call.1} parent=1 // loop_exit
      _
    %1562 = vsyncpa [#allocation4], 1
    %s1563 = scalar_lea.sflag [#allocation4], 1
    %1564 = vsyncpa %s1563, 1
    %1565 = vsyncpa [#allocation5], 1
    %s1566 = scalar_lea.sflag [#allocation5], 1
    %1567 = vsyncpa %s1566, 1

</llo_original>
